<compile_context>
chip_gen: v7x
topology: tpu7x:2x2x1
jax: 0.10.0
libtpu: 0.0.40
codegen_flags: <defaults>
</compile_context>

<pallas_src>
import jax
import jax.numpy as jnp
from jax.experimental import pallas as pl
from jax.experimental.pallas import tpu as pltpu

_LANE = 128
_VMEM_LIMIT = None


def _vmem_limit_bytes():
    """~75% of physical VMEM (96 MiB on v5e/v6e, 48 MiB on v7x), clamped."""
    global _VMEM_LIMIT
    if _VMEM_LIMIT is None:
        limit = 48 * 1024 * 1024
        try:
            cap = getattr(pltpu.get_tpu_info(), "vmem_capacity_bytes", None)
            if cap:
                limit = int(cap) * 3 // 4
        except Exception:
            pass
        _VMEM_LIMIT = max(32 * 1024 * 1024, min(limit, 100 * 1024 * 1024))
    return _VMEM_LIMIT


def _pick_row_tile(ho, wo, cout):
    """Largest divisor th of ho such that the (th*wo, cout) f32 accumulator is
    <= ~64 KiB (keeps it vreg-resident; no per-tap VMEM round trips)."""
    max_rows = max(wo, min(512, (64 * 1024) // max(4 * cout, 1)))
    best = 1
    for th in range(1, ho + 1):
        if ho % th == 0 and th * wo <= max_rows:
            best = th
    return best


# ----------------------------------------------------------------------------
# Fused conv + folded-BN (+ fused shortcut) (+ ReLU) kernel.
#   packed=True : x block is (1, th, Wo, kh*kw*Cin) (taps pre-packed along K)
#                 -> one MXU contraction per tile.
#   packed=False: x block is the per-batch phase slab (P, Hq, Wq, Cin); the
#                 kernel extracts the taps as contiguous windows and runs one
#                 K=Cin dot per tap, accumulating in a small f32 value.
#   shortcut: None | "add" (identity residual, f32) | "conv" (fused 1x1+BN).
# ----------------------------------------------------------------------------
def _make_kernel(*, packed, taps, th, wo, cin, cout, shortcut, apply_relu):
    rows = th * wo

    def kernel(*refs):
        i = 0
        x_ref = refs[i]; i += 1
        w_ref = refs[i]; i += 1
        scale_ref = refs[i]; i += 1
        bias_ref = refs[i]; i += 1
        if shortcut == "conv":
            scx_ref, scw_ref, scs_ref, scb_ref = refs[i:i + 4]
            i += 4
        elif shortcut == "add":
            res_ref = refs[i]; i += 1
        o_ref = refs[i]

        if packed:
            # All taps already packed along K -> single MXU contraction; the
            # accumulator is produced and consumed once (no per-tap RMW).
            lhs = x_ref[...].reshape(rows, x_ref.shape[-1])
            acc = jnp.dot(lhs, w_ref[...], preferred_element_type=jnp.float32)
        else:
            # Per-tap loop (large Cin): K = cin per dot; acc kept small enough
            # (<= ~64 KiB) that it stays in vregs across the unrolled taps.
            row0 = pl.multiple_of(pl.program_id(1) * th, th)
            acc = jnp.zeros((rows, cout), jnp.float32)
            for t_i, (p, rh, rw) in enumerate(taps):
                win = x_ref[p, pl.ds(row0 + rh, th), pl.ds(rw, wo), :]
                acc = acc + jnp.dot(win.reshape(rows, cin), w_ref[t_i],
                                    preferred_element_type=jnp.float32)

        out = acc * scale_ref[...] + bias_ref[...]        # folded BN (f32, VPU)

        if shortcut == "conv":
            # Fused 1x1 projection shortcut + its folded BN (never hits HBM).
            sc = jnp.dot(scx_ref[...].reshape(rows, scx_ref.shape[-1]),
                         scw_ref[...], preferred_element_type=jnp.float32)
            out = out + (sc * scs_ref[...] + scb_ref[...])
        elif shortcut == "add":
            out = out + res_ref[...].reshape(rows, cout).astype(jnp.float32)

        if apply_relu:
            out = jnp.maximum(out, 0.0)
        o_ref[...] = out.reshape(1, th, wo, cout).astype(o_ref.dtype)

    return kernel


def conv_bn_act(x, w_oihw, gamma, beta, rmean, rvar, *, stride, padding,
                apply_relu, out_dtype, shortcut=None, eps=1e-5):
    """Fused conv(kxk, stride) + folded BN [+ fused shortcut] [+ ReLU].

    x:        (N, H, W, Cin) bf16 activations.
    w_oihw:   (Cout, Cin, kh, kw) float weights.
    shortcut: None
              | ("add", res)                      res: (N, Ho, Wo, Cout) f32
              | ("conv", x_sc, w_sc, g, b, rm, rv) x_sc: (N, Ho, Wo, Csc) bf16,
                                                   w_sc: (Cout, Csc, 1, 1)
    Returns (N, Ho, Wo, Cout) in out_dtype (no channel padding).
    """
    N, H, W, Cin = x.shape
    Cout, Cin_w, kh, kw = w_oihw.shape
    assert Cin_w == Cin, (Cin_w, Cin)
    s = stride
    Ho = (H + 2 * padding - kh) // s + 1
    Wo = (W + 2 * padding - kw) // s + 1

    # Folded inference-mode BatchNorm -> per-channel f32 scale/bias.
    inv = gamma / jnp.sqrt(rvar + eps)
    scale = inv.astype(jnp.float32).reshape(1, Cout)
    bias = (beta - rmean * inv).astype(jnp.float32).reshape(1, Cout)

    wt = jnp.transpose(w_oihw, (2, 3, 1, 0))                 # (kh, kw, Cin, Cout)

    packed = kh * kw * Cin <= _LANE
    th = _pick_row_tile(Ho, Wo, Cout)
    grid = (N, Ho // th)

    if packed:
        # Host-side K-packing of the taps (only when kh*kw*Cin <= 128, so the
        # inflated lhs stays small and lane-dense): single contraction / tile.
        xp = jnp.pad(x, ((0, 0), (padding, padding), (padding, padding), (0, 0)))
        cols = [xp[:, dh:dh + s * Ho:s, dw:dw + s * Wo:s, :]
                for dh in range(kh) for dw in range(kw)]
        x_in = jnp.concatenate(cols, axis=-1).astype(jnp.bfloat16)  # (N,Ho,Wo,K)
        K = kh * kw * Cin
        w_in = wt.reshape(K, Cout).astype(jnp.bfloat16)
        taps = None
        x_spec = pl.BlockSpec((1, th, Wo, K), lambda n, t: (n, t, 0, 0))
        w_spec = pl.BlockSpec((K, Cout), lambda n, t: (0, 0))
    else:
        # Phase (space-to-depth) decomposition; per-batch slab stays resident in
        # VMEM across the row tiles, taps extracted in-kernel (no HBM im2col).
        Hq = Ho + (kh - 1) // s
        Wq = Wo + (kw - 1) // s
        pad_b = max(0, s * Hq - H - padding)
        pad_r = max(0, s * Wq - W - padding)
        xp = jnp.pad(x, ((0, 0), (padding, pad_b), (padding, pad_r), (0, 0)))
        P = s * s
        phases = [xp[:, ph::s, pw::s, :][:, :Hq, :Wq, :]
                  for ph in range(s) for pw in range(s)]
        x_in = jnp.stack(phases, axis=1).reshape(N * P, Hq, Wq, Cin)
        x_in = x_in.astype(jnp.bfloat16)
        taps, wlist = [], []
        for dh in range(kh):
            for dw in range(kw):
                taps.append(((dh % s) * s + (dw % s), dh // s, dw // s))
                wlist.append(wt[dh, dw])
        w_in = jnp.stack(wlist, axis=0).astype(jnp.bfloat16)  # (T, Cin, Cout)
        x_spec = pl.BlockSpec((P, Hq, Wq, Cin), lambda n, t: (n, 0, 0, 0))
        w_spec = pl.BlockSpec(w_in.shape, lambda n, t: (0, 0, 0))

    args = [x_in, w_in, scale, bias]
    in_specs = [x_spec, w_spec,
                pl.BlockSpec((1, Cout), lambda n, t: (0, 0)),
                pl.BlockSpec((1, Cout), lambda n, t: (0, 0))]

    flops = 2 * N * Ho * Wo * kh * kw * Cin * Cout
    sc_mode = None
    if shortcut is not None:
        sc_mode = shortcut[0]
        if sc_mode == "conv":
            _, x_sc, w_sc, g_sc, b_sc, rm_sc, rv_sc = shortcut
            Csc = x_sc.shape[-1]
            inv_sc = g_sc / jnp.sqrt(rv_sc + eps)
            sc_scale = inv_sc.astype(jnp.float32).reshape(1, Cout)
            sc_bias = (b_sc - rm_sc * inv_sc).astype(jnp.float32).reshape(1, Cout)
            w_sc_mat = jnp.transpose(w_sc[:, :, 0, 0], (1, 0)).astype(jnp.bfloat16)
            args += [x_sc.astype(jnp.bfloat16), w_sc_mat, sc_scale, sc_bias]
            in_specs += [pl.BlockSpec((1, th, Wo, Csc), lambda n, t: (n, t, 0, 0)),
                         pl.BlockSpec((Csc, Cout), lambda n, t: (0, 0)),
                         pl.BlockSpec((1, Cout), lambda n, t: (0, 0)),
                         pl.BlockSpec((1, Cout), lambda n, t: (0, 0))]
            flops += 2 * N * Ho * Wo * Csc * Cout
        elif sc_mode == "add":
            _, res = shortcut
            args.append(res)
            in_specs.append(pl.BlockSpec((1, th, Wo, Cout),
                                         lambda n, t: (n, t, 0, 0)))

    kernel = _make_kernel(packed=packed,
                          taps=tuple(taps) if taps is not None else None,
                          th=th, wo=Wo, cin=Cin, cout=Cout,
                          shortcut=sc_mode, apply_relu=apply_relu)

    bytes_accessed = sum(int(a.size) * a.dtype.itemsize for a in args) \
        + N * Ho * Wo * Cout * jnp.dtype(out_dtype).itemsize

    return pl.pallas_call(
        kernel,
        out_shape=jax.ShapeDtypeStruct((N, Ho, Wo, Cout), out_dtype),
        grid=grid,
        in_specs=in_specs,
        out_specs=pl.BlockSpec((1, th, Wo, Cout), lambda n, t: (n, t, 0, 0)),
        compiler_params=pltpu.CompilerParams(
            dimension_semantics=("parallel", "parallel"),
            vmem_limit_bytes=_vmem_limit_bytes()),
        cost_estimate=pl.CostEstimate(flops=int(flops), transcendentals=0,
                                      bytes_accessed=int(bytes_accessed)),
    )(*args)


# ----------------------------------------------------------------------------
# ResidualBlock forward (NCHW in / NCHW out, matching the PyTorch module)
# ----------------------------------------------------------------------------
def residual_block_forward(x_nchw, params, *, stride):
    x_f32 = jnp.transpose(x_nchw, (0, 2, 3, 1)).astype(jnp.float32)   # NHWC
    x_bf16 = x_f32.astype(jnp.bfloat16)
    N, H, W, Cin = x_f32.shape
    Cout = params["w1"].shape[0]

    # conv1 (3x3, stride) + bn1 + ReLU  ->  bf16 activations, unpadded channels.
    y1 = conv_bn_act(x_bf16, params["w1"], params["bn1_g"], params["bn1_b"],
                     params["bn1_rm"], params["bn1_rv"], stride=stride,
                     padding=1, apply_relu=True, out_dtype=jnp.bfloat16)

    Ho = (H + 2 - 3) // stride + 1
    Wo = (W + 2 - 3) // stride + 1
    if stride != 1 or Cin != Cout:
        # Projection shortcut: 1x1 stride-s conv == spatial subsample, fused
        # into the conv2 kernel as a second contraction (never hits HBM).
        x_sub = x_bf16[:, ::stride, ::stride, :][:, :Ho, :Wo, :]
        shortcut = ("conv", x_sub, params["wsc"], params["bnsc_g"],
                    params["bnsc_b"], params["bnsc_rm"], params["bnsc_rv"])
    else:
        # Identity shortcut: original (unpadded) f32 input added in-kernel.
        shortcut = ("add", x_f32)

    # conv2 (3x3, stride 1) + bn2 + shortcut + ReLU, fully fused.
    out = conv_bn_act(y1, params["w2"], params["bn2_g"], params["bn2_b"],
                      params["bn2_rm"], params["bn2_rv"], stride=1, padding=1,
                      apply_relu=True, out_dtype=jnp.float32, shortcut=shortcut)
    return jnp.transpose(out, (0, 3, 1, 2))                 # NHWC -> NCHW


# ----------------------------------------------------------------------------
# Reference mirroring the kernel's precision (bf16 MXU, f32 accumulation/BN)
# ----------------------------------------------------------------------------
def _ref_conv_bf16(x_bf16, w_oihw, stride, padding):
    w = jnp.transpose(w_oihw, (2, 3, 1, 0)).astype(jnp.bfloat16)
    return jax.lax.conv_general_dilated(
        x_bf16, w, window_strides=(stride, stride),
        padding=((padding, padding), (padding, padding)),
        dimension_numbers=("NHWC", "HWIO", "NHWC"),
        preferred_element_type=jnp.float32)


def _ref_bn(x, g, b, rm, rv, eps=1e-5):
    return (x - rm) / jnp.sqrt(rv + eps) * g + b


def residual_block_reference(x_nchw, params, *, stride):
    x = jnp.transpose(x_nchw, (0, 2, 3, 1)).astype(jnp.float32)
    xb = x.astype(jnp.bfloat16)
    Cin = x.shape[-1]
    Cout = params["w1"].shape[0]
    y1 = jax.nn.relu(_ref_bn(_ref_conv_bf16(xb, params["w1"], stride, 1),
                             params["bn1_g"], params["bn1_b"],
                             params["bn1_rm"], params["bn1_rv"]))
    y2 = _ref_bn(_ref_conv_bf16(y1.astype(jnp.bfloat16), params["w2"], 1, 1),
                 params["bn2_g"], params["bn2_b"],
                 params["bn2_rm"], params["bn2_rv"])
    if stride != 1 or Cin != Cout:
        sc = _ref_bn(_ref_conv_bf16(xb, params["wsc"], stride, 0),
                     params["bnsc_g"], params["bnsc_b"],
                     params["bnsc_rm"], params["bnsc_rv"])
    else:
        sc = x
    out = jax.nn.relu(y2 + sc)
    return jnp.transpose(out, (0, 3, 1, 2))


# ----------------------------------------------------------------------------
# Deterministic parameter construction + run
# ----------------------------------------------------------------------------
def make_params(key, in_channels, out_channels, stride):
    ks = jax.random.split(key, 12)
    p = {
        "w1": 0.1 * jax.random.normal(ks[0], (out_channels, in_channels, 3, 3), jnp.float32),
        "w2": 0.1 * jax.random.normal(ks[1], (out_channels, out_channels, 3, 3), jnp.float32),
        "bn1_g": jax.random.uniform(ks[2], (out_channels,), jnp.float32, 0.5, 1.5),
        "bn1_b": 0.1 * jax.random.normal(ks[3], (out_channels,), jnp.float32),
        "bn1_rm": 0.1 * jax.random.normal(ks[4], (out_channels,), jnp.float32),
        "bn1_rv": jax.random.uniform(ks[5], (out_channels,), jnp.float32, 0.5, 1.5),
        "bn2_g": jax.random.uniform(ks[6], (out_channels,), jnp.float32, 0.5, 1.5),
        "bn2_b": 0.1 * jax.random.normal(ks[7], (out_channels,), jnp.float32),
        "bn2_rm": 0.1 * jax.random.normal(ks[8], (out_channels,), jnp.float32),
        "bn2_rv": jax.random.uniform(ks[9], (out_channels,), jnp.float32, 0.5, 1.5),
    }
    if stride != 1 or in_channels != out_channels:
        ks2 = jax.random.split(ks[10], 5)
        p["wsc"] = 0.1 * jax.random.normal(ks2[0], (out_channels, in_channels, 1, 1), jnp.float32)
        p["bnsc_g"] = jax.random.uniform(ks2[1], (out_channels,), jnp.float32, 0.5, 1.5)
        p["bnsc_b"] = 0.1 * jax.random.normal(ks2[2], (out_channels,), jnp.float32)
        p["bnsc_rm"] = 0.1 * jax.random.normal(ks2[3], (out_channels,), jnp.float32)
        p["bnsc_rv"] = jax.random.uniform(ks2[4], (out_channels,), jnp.float32, 0.5, 1.5)
    return p


if __name__ == "__main__":
    key = jax.random.PRNGKey(0)
    k1, k2, k3, k4, k5, k6 = jax.random.split(key, 6)
    fwd = jax.jit(residual_block_forward, static_argnames=("stride",))

    # 1) Downsample block (K-packed convs + fused 1x1 projection shortcut):
    #    batch=2, Cin=4 -> Cout=8, 16x16 spatial, stride=2.
    N, Cin, Cout, H, W, stride = 2, 4, 8, 16, 16, 2
    x = jax.random.normal(k1, (N, Cin, H, W), jnp.float32)
    p = make_params(k2, Cin, Cout, stride)
    out = jax.block_until_ready(fwd(x, p, stride=stride))
    ref = jax.block_until_ready(residual_block_reference(x, p, stride=stride))
    assert out.shape == (N, Cout, H // stride, W // stride), out.shape
    err = float(jnp.max(jnp.abs(out - ref)))
    assert jnp.allclose(out, ref, atol=2e-3, rtol=2e-3), err

    # 2) Identity-shortcut block, small channels (K-packed path + fused add).
    x2 = jax.random.normal(k3, (2, 8, 8, 8), jnp.float32)
    p2 = make_params(k4, 8, 8, 1)
    out2 = jax.block_until_ready(fwd(x2, p2, stride=1))
    ref2 = jax.block_until_ready(residual_block_reference(x2, p2, stride=1))
    assert out2.shape == (2, 8, 8, 8), out2.shape
    err2 = float(jnp.max(jnp.abs(out2 - ref2)))
    assert jnp.allclose(out2, ref2, atol=2e-3, rtol=2e-3), err2

    # 3) Identity-shortcut block, larger channels (per-tap in-kernel path).
    x3 = jax.random.normal(k5, (2, 32, 8, 8), jnp.float32)
    p3 = make_params(k6, 32, 32, 1)
    out3 = jax.block_until_ready(fwd(x3, p3, stride=1))
    ref3 = jax.block_until_ready(residual_block_reference(x3, p3, stride=1))
    assert out3.shape == (2, 32, 8, 8), out3.shape
    err3 = float(jnp.max(jnp.abs(out3 - ref3)))
    assert jnp.allclose(out3, ref3, atol=2e-3, rtol=2e-3), err3

    print("KERNEL_OK")
</pallas_src>

<mosaic_0001>
module attributes {stable_mosaic.version = 11 : i64} {
  func.func @kernel(%arg0: i32, %arg1: i32, %arg2: memref<1x8x8x36xbf16, #tpu.memory_space<vmem>>, %arg3: memref<36x8xbf16, #tpu.memory_space<vmem>>, %arg4: memref<1x8xf32, #tpu.memory_space<vmem>>, %arg5: memref<1x8xf32, #tpu.memory_space<vmem>>, %arg6: memref<1x8x8x8xbf16, #tpu.memory_space<vmem>>) attributes {dimension_semantics = [#tpu.dimension_semantics<parallel>, #tpu.dimension_semantics<parallel>], iteration_bounds = array<i64: 2, 1>, scalar_prefetch = 0 : i64, scratch_operands = 0 : i64, tpu.core_type = #tpu.core_type<tc>, window_params = [{transform_indices = @transform_0, window_bounds = array<i64: 1, 8, 8, 36>}, {pipeline_mode = #tpu.pipeline_mode<synchronous>, transform_indices = @transform_1, window_bounds = array<i64: 36, 8>}, {pipeline_mode = #tpu.pipeline_mode<synchronous>, transform_indices = @transform_2, window_bounds = array<i64: 1, 8>}, {pipeline_mode = #tpu.pipeline_mode<synchronous>, transform_indices = @transform_3, window_bounds = array<i64: 1, 8>}, {transform_indices = @transform_4, window_bounds = array<i64: 1, 8, 8, 8>}]} {
    %c0 = arith.constant 0 : index
    %c0_0 = arith.constant 0 : index
    %c0_1 = arith.constant 0 : index
    %c0_2 = arith.constant 0 : index
    %0 = vector.load %arg2[%c0, %c0_0, %c0_1, %c0_2] : memref<1x8x8x36xbf16, #tpu.memory_space<vmem>>, vector<1x8x8x36xbf16>
    %1 = vector.shape_cast %0 : vector<1x8x8x36xbf16> to vector<64x36xbf16>
    %c0_3 = arith.constant 0 : index
    %c0_4 = arith.constant 0 : index
    %2 = vector.load %arg3[%c0_3, %c0_4] : memref<36x8xbf16, #tpu.memory_space<vmem>>, vector<36x8xbf16>
    %cst = arith.constant dense<0.000000e+00> : vector<64x8xf32>
    %3 = tpu.matmul %1, %2, %cst {dimension_numbers = #tpu.dot_dimension_numbers<[1], [0], [0], [1], [0, 0, 1, 1], [], []>} : vector<64x36xbf16>, vector<36x8xbf16>, vector<64x8xf32> -> vector<64x8xf32>
    %c0_5 = arith.constant 0 : index
    %c0_6 = arith.constant 0 : index
    %4 = vector.load %arg4[%c0_5, %c0_6] : memref<1x8xf32, #tpu.memory_space<vmem>>, vector<1x8xf32>
    %5 = vector.broadcast %4 : vector<1x8xf32> to vector<64x8xf32>
    %6 = arith.mulf %3, %5 : vector<64x8xf32>
    %c0_7 = arith.constant 0 : index
    %c0_8 = arith.constant 0 : index
    %7 = vector.load %arg5[%c0_7, %c0_8] : memref<1x8xf32, #tpu.memory_space<vmem>>, vector<1x8xf32>
    %8 = vector.broadcast %7 : vector<1x8xf32> to vector<64x8xf32>
    %9 = arith.addf %6, %8 : vector<64x8xf32>
    %cst_9 = arith.constant 0.000000e+00 : f32
    %10 = vector.broadcast %cst_9 : f32 to vector<64x8xf32>
    %11 = arith.maximumf %9, %10 : vector<64x8xf32>
    %12 = vector.shape_cast %11 : vector<64x8xf32> to vector<1x8x8x8xf32>
    %13 = arith.truncf %12 : vector<1x8x8x8xf32> to vector<1x8x8x8xbf16>
    %c0_10 = arith.constant 0 : index
    %c0_11 = arith.constant 0 : index
    %c0_12 = arith.constant 0 : index
    %c0_13 = arith.constant 0 : index
    %14 = vector.load %arg6[%c0_10, %c0_11, %c0_12, %c0_13] : memref<1x8x8x8xbf16, #tpu.memory_space<vmem>>, vector<1x8x8x8xbf16>
    tpu.vector_store %arg6[%c0_10, %c0_11, %c0_12, %c0_13], %13 {strides = array<i32>} : memref<1x8x8x8xbf16, #tpu.memory_space<vmem>>, vector<1x8x8x8xbf16>,
    return
  }
  func.func @transform_0(%arg0: i32, %arg1: i32) -> (i32, i32, i32, i32) {
    %c0_i32 = arith.constant 0 : i32
    %c0_i32_0 = arith.constant 0 : i32
    %c0_i32_1 = arith.constant 0 : i32
    return %arg0, %arg1, %c0_i32, %c0_i32_0 : i32, i32, i32, i32
  }
  func.func @transform_1(%arg0: i32, %arg1: i32) -> (i32, i32) {
    %c0_i32 = arith.constant 0 : i32
    %c0_i32_0 = arith.constant 0 : i32
    %c0_i32_1 = arith.constant 0 : i32
    return %c0_i32, %c0_i32_0 : i32, i32
  }
  func.func @transform_2(%arg0: i32, %arg1: i32) -> (i32, i32) {
    %c0_i32 = arith.constant 0 : i32
    %c0_i32_0 = arith.constant 0 : i32
    %c0_i32_1 = arith.constant 0 : i32
    return %c0_i32, %c0_i32_0 : i32, i32
  }
  func.func @transform_3(%arg0: i32, %arg1: i32) -> (i32, i32) {
    %c0_i32 = arith.constant 0 : i32
    %c0_i32_0 = arith.constant 0 : i32
    %c0_i32_1 = arith.constant 0 : i32
    return %c0_i32, %c0_i32_0 : i32, i32
  }
  func.func @transform_4(%arg0: i32, %arg1: i32) -> (i32, i32, i32, i32) {
    %c0_i32 = arith.constant 0 : i32
    %c0_i32_0 = arith.constant 0 : i32
    %c0_i32_1 = arith.constant 0 : i32
    return %arg0, %arg1, %c0_i32, %c0_i32_0 : i32, i32, i32, i32
  }
}

module attributes {stable_mosaic.version = 11 : i64} {
  func.func @kernel(%arg0: i32, %arg1: i32, %arg2: memref<1x8x8x72xbf16, #tpu.memory_space<vmem>>, %arg3: memref<72x8xbf16, #tpu.memory_space<vmem>>, %arg4: memref<1x8xf32, #tpu.memory_space<vmem>>, %arg5: memref<1x8xf32, #tpu.memory_space<vmem>>, %arg6: memref<1x8x8x4xbf16, #tpu.memory_space<vmem>>, %arg7: memref<4x8xbf16, #tpu.memory_space<vmem>>, %arg8: memref<1x8xf32, #tpu.memory_space<vmem>>, %arg9: memref<1x8xf32, #tpu.memory_space<vmem>>, %arg10: memref<1x8x8x8xf32, #tpu.memory_space<vmem>>) attributes {dimension_semantics = [#tpu.dimension_semantics<parallel>, #tpu.dimension_semantics<parallel>], iteration_bounds = array<i64: 2, 1>, scalar_prefetch = 0 : i64, scratch_operands = 0 : i64, tpu.core_type = #tpu.core_type<tc>, window_params = [{transform_indices = @transform_0, window_bounds = array<i64: 1, 8, 8, 72>}, {pipeline_mode = #tpu.pipeline_mode<synchronous>, transform_indices = @transform_1, window_bounds = array<i64: 72, 8>}, {pipeline_mode = #tpu.pipeline_mode<synchronous>, transform_indices = @transform_2, window_bounds = array<i64: 1, 8>}, {pipeline_mode = #tpu.pipeline_mode<synchronous>, transform_indices = @transform_3, window_bounds = array<i64: 1, 8>}, {transform_indices = @transform_4, window_bounds = array<i64: 1, 8, 8, 4>}, {pipeline_mode = #tpu.pipeline_mode<synchronous>, transform_indices = @transform_5, window_bounds = array<i64: 4, 8>}, {pipeline_mode = #tpu.pipeline_mode<synchronous>, transform_indices = @transform_6, window_bounds = array<i64: 1, 8>}, {pipeline_mode = #tpu.pipeline_mode<synchronous>, transform_indices = @transform_7, window_bounds = array<i64: 1, 8>}, {transform_indices = @transform_8, window_bounds = array<i64: 1, 8, 8, 8>}]} {
    %c0 = arith.constant 0 : index
    %c0_0 = arith.constant 0 : index
    %c0_1 = arith.constant 0 : index
    %c0_2 = arith.constant 0 : index
    %0 = vector.load %arg2[%c0, %c0_0, %c0_1, %c0_2] : memref<1x8x8x72xbf16, #tpu.memory_space<vmem>>, vector<1x8x8x72xbf16>
    %1 = vector.shape_cast %0 : vector<1x8x8x72xbf16> to vector<64x72xbf16>
    %c0_3 = arith.constant 0 : index
    %c0_4 = arith.constant 0 : index
    %2 = vector.load %arg3[%c0_3, %c0_4] : memref<72x8xbf16, #tpu.memory_space<vmem>>, vector<72x8xbf16>
    %cst = arith.constant dense<0.000000e+00> : vector<64x8xf32>
    %3 = tpu.matmul %1, %2, %cst {dimension_numbers = #tpu.dot_dimension_numbers<[1], [0], [0], [1], [0, 0, 1, 1], [], []>} : vector<64x72xbf16>, vector<72x8xbf16>, vector<64x8xf32> -> vector<64x8xf32>
    %c0_5 = arith.constant 0 : index
    %c0_6 = arith.constant 0 : index
    %4 = vector.load %arg4[%c0_5, %c0_6] : memref<1x8xf32, #tpu.memory_space<vmem>>, vector<1x8xf32>
    %5 = vector.broadcast %4 : vector<1x8xf32> to vector<64x8xf32>
    %6 = arith.mulf %3, %5 : vector<64x8xf32>
    %c0_7 = arith.constant 0 : index
    %c0_8 = arith.constant 0 : index
    %7 = vector.load %arg5[%c0_7, %c0_8] : memref<1x8xf32, #tpu.memory_space<vmem>>, vector<1x8xf32>
    %8 = vector.broadcast %7 : vector<1x8xf32> to vector<64x8xf32>
    %9 = arith.addf %6, %8 : vector<64x8xf32>
    %c0_9 = arith.constant 0 : index
    %c0_10 = arith.constant 0 : index
    %c0_11 = arith.constant 0 : index
    %c0_12 = arith.constant 0 : index
    %10 = vector.load %arg6[%c0_9, %c0_10, %c0_11, %c0_12] : memref<1x8x8x4xbf16, #tpu.memory_space<vmem>>, vector<1x8x8x4xbf16>
    %11 = vector.shape_cast %10 : vector<1x8x8x4xbf16> to vector<64x4xbf16>
    %c0_13 = arith.constant 0 : index
    %c0_14 = arith.constant 0 : index
    %12 = vector.load %arg7[%c0_13, %c0_14] : memref<4x8xbf16, #tpu.memory_space<vmem>>, vector<4x8xbf16>
    %cst_15 = arith.constant dense<0.000000e+00> : vector<64x8xf32>
    %13 = tpu.matmul %11, %12, %cst_15 {dimension_numbers = #tpu.dot_dimension_numbers<[1], [0], [0], [1], [0, 0, 1, 1], [], []>} : vector<64x4xbf16>, vector<4x8xbf16>, vector<64x8xf32> -> vector<64x8xf32>
    %c0_16 = arith.constant 0 : index
    %c0_17 = arith.constant 0 : index
    %14 = vector.load %arg8[%c0_16, %c0_17] : memref<1x8xf32, #tpu.memory_space<vmem>>, vector<1x8xf32>
    %15 = vector.broadcast %14 : vector<1x8xf32> to vector<64x8xf32>
    %16 = arith.mulf %13, %15 : vector<64x8xf32>
    %c0_18 = arith.constant 0 : index
    %c0_19 = arith.constant 0 : index
    %17 = vector.load %arg9[%c0_18, %c0_19] : memref<1x8xf32, #tpu.memory_space<vmem>>, vector<1x8xf32>
    %18 = vector.broadcast %17 : vector<1x8xf32> to vector<64x8xf32>
    %19 = arith.addf %16, %18 : vector<64x8xf32>
    %20 = arith.addf %9, %19 : vector<64x8xf32>
    %cst_20 = arith.constant 0.000000e+00 : f32
    %21 = vector.broadcast %cst_20 : f32 to vector<64x8xf32>
    %22 = arith.maximumf %20, %21 : vector<64x8xf32>
    %23 = vector.shape_cast %22 : vector<64x8xf32> to vector<1x8x8x8xf32>
    %c0_21 = arith.constant 0 : index
    %c0_22 = arith.constant 0 : index
    %c0_23 = arith.constant 0 : index
    %c0_24 = arith.constant 0 : index
    %24 = vector.load %arg10[%c0_21, %c0_22, %c0_23, %c0_24] : memref<1x8x8x8xf32, #tpu.memory_space<vmem>>, vector<1x8x8x8xf32>
    tpu.vector_store %arg10[%c0_21, %c0_22, %c0_23, %c0_24], %23 {strides = array<i32>} : memref<1x8x8x8xf32, #tpu.memory_space<vmem>>, vector<1x8x8x8xf32>,
    return
  }
  func.func @transform_0(%arg0: i32, %arg1: i32) -> (i32, i32, i32, i32) {
    %c0_i32 = arith.constant 0 : i32
    %c0_i32_0 = arith.constant 0 : i32
    %c0_i32_1 = arith.constant 0 : i32
    return %arg0, %arg1, %c0_i32, %c0_i32_0 : i32, i32, i32, i32
  }
  func.func @transform_1(%arg0: i32, %arg1: i32) -> (i32, i32) {
    %c0_i32 = arith.constant 0 : i32
    %c0_i32_0 = arith.constant 0 : i32
    %c0_i32_1 = arith.constant 0 : i32
    return %c0_i32, %c0_i32_0 : i32, i32
  }
  func.func @transform_2(%arg0: i32, %arg1: i32) -> (i32, i32) {
    %c0_i32 = arith.constant 0 : i32
    %c0_i32_0 = arith.constant 0 : i32
    %c0_i32_1 = arith.constant 0 : i32
    return %c0_i32, %c0_i32_0 : i32, i32
  }
  func.func @transform_3(%arg0: i32, %arg1: i32) -> (i32, i32) {
    %c0_i32 = arith.constant 0 : i32
    %c0_i32_0 = arith.constant 0 : i32
    %c0_i32_1 = arith.constant 0 : i32
    return %c0_i32, %c0_i32_0 : i32, i32
  }
  func.func @transform_4(%arg0: i32, %arg1: i32) -> (i32, i32, i32, i32) {
    %c0_i32 = arith.constant 0 : i32
    %c0_i32_0 = arith.constant 0 : i32
    %c0_i32_1 = arith.constant 0 : i32
    return %arg0, %arg1, %c0_i32, %c0_i32_0 : i32, i32, i32, i32
  }
  func.func @transform_5(%arg0: i32, %arg1: i32) -> (i32, i32) {
    %c0_i32 = arith.constant 0 : i32
    %c0_i32_0 = arith.constant 0 : i32
    %c0_i32_1 = arith.constant 0 : i32
    return %c0_i32, %c0_i32_0 : i32, i32
  }
  func.func @transform_6(%arg0: i32, %arg1: i32) -> (i32, i32) {
    %c0_i32 = arith.constant 0 : i32
    %c0_i32_0 = arith.constant 0 : i32
    %c0_i32_1 = arith.constant 0 : i32
    return %c0_i32, %c0_i32_0 : i32, i32
  }
  func.func @transform_7(%arg0: i32, %arg1: i32) -> (i32, i32) {
    %c0_i32 = arith.constant 0 : i32
    %c0_i32_0 = arith.constant 0 : i32
    %c0_i32_1 = arith.constant 0 : i32
    return %c0_i32, %c0_i32_0 : i32, i32
  }
  func.func @transform_8(%arg0: i32, %arg1: i32) -> (i32, i32, i32, i32) {
    %c0_i32 = arith.constant 0 : i32
    %c0_i32_0 = arith.constant 0 : i32
    %c0_i32_1 = arith.constant 0 : i32
    return %arg0, %arg1, %c0_i32, %c0_i32_0 : i32, i32, i32, i32
  }
}

</mosaic_0001>

<llo_original>
// kernel: residual_block_forward.2
$region0: #{residual_block_forward.2}
  #allocation0 [shape = 'u32[]', space=smem, size = 0x4, offset = 0x4, fixed_abs, tag = 'smem constant byte address 0x4 - core index']
  #allocation1 [shape = 'u32[144,128]{1,0:T(1,128)}', space=vmem, size = 0x12000, scoped, tag = 'internal scratch']
  %s0 = inlined_call_operand.vmem [shape: bf16[2,8,8,36], index: 0, kind: input, shape index: {}]
  %s1 = inlined_call_operand.vmem [shape: bf16[36,8], index: 1, kind: input, shape index: {}]
  %s2 = inlined_call_operand.vmem [shape: f32[1,8], index: 2, kind: input, shape index: {}]
  %s3 = inlined_call_operand.vmem [shape: f32[1,8], index: 3, kind: input, shape index: {}]
  %s4 = inlined_call_operand.vmem [shape: bf16[2,8,8,8], index: 4, kind: output, shape index: {}]
  %s5 = sld [smem:[#allocation0]]
  $region49: #{residual_block_forward.2} parent=0
    _
  %s7 = ssub.s32 1, %s5
  %s8 = scalar_select 0, %s7, %s5
  loop: start=0, step=1, limit=4
  $region2: #{residual_block_forward.2} parent=0 // loop_pre_header
    _
  $region3: #{residual_block_forward.2} parent=0 // loop_header
    %s10 = sphi 0, %s14
    %p11 = scmp.ge.s32.totalorder %s10, 4
    %s17 = sphi 0, %s29
    %s18 = sphi 0, %s25
    %s19 = sphi 0, %s17
    %s20 = sphi 0, %s18
    %s21 = sphi 0, %s19
    %s22 = sphi 0, %s20
    %s34 = sphi 0, %s36
    %s37 = sphi 0, %s34
    %s38 = sphi 0, %s37
    %s54 = sphi 0, %s38
    %s58 = sphi 0, %s58
    %s60 = sphi 0, %s58
    %s61 = sphi 0, %s60
    %s75 = sphi 0, %s61
    %s79 = sphi 0, %s79
    %s81 = sphi 0, %s79
    %s82 = sphi 0, %s81
    %s96 = sphi 0, %s82
    %s100 = sphi 0, %s100
    %s102 = sphi 0, %s100
    %s103 = sphi 0, %s102
    %s117 = sphi 0, %s103
    %s125 = sphi 0, %s127
    %s128 = sphi 0, %s125
    %s129 = sphi 0, %s128
    %s145 = sphi 0, %s129
  $region4: #{residual_block_forward.2} parent=0 // loop_header_branch
    %13 = sbr.rel (%p11) target = $region8
  $region5: #{residual_block_forward.2} parent=0 // loop_body
    %s15 = ssub.s32 %s10, 1
    %s16 = ssub.s32 %s10, 2
    %s23 = sadd.s32 1, %s18
    %p24 = scmp.ge.s32.totalorder %s23, 1
    %s25 = scalar_select %p24, 0, %s23
    %s26 = sadd.s32 1, %s17
    %s27 = scalar_select %p24, %s26, %s17
    %p28 = scmp.ge.s32.totalorder %s27, 2
    %s29 = scalar_select %p28, 0, %s27
    %s30 = ssub.s32 %s17, %s29
    %s31 = ssub.s32 %s18, %s25
    %s32 = sor.u32 %s30, %s31
    %p33 = scmp.eq.s32.totalorder %s32, 0
    %s35 = sadd.s32 %s34, 1
    %s36 = scalar_select %p33, %s34, %s35
    %p39 = pneg %p33
    %p40 = scmp.eq.s32.totalorder %s10, 1
    %p41 = por %p39, %p40
    %p42 = scmp.ne.s32.totalorder %s34, %s37
    %p43 = scmp.eq.s32.totalorder %s10, 0
    %p44 = por %p42, %p43
    %p45 = scmp.ne.s32.totalorder %s34, %s37
    %p46 = scmp.eq.s32.totalorder %s15, 1
    %p47 = por %p45, %p46
    %p48 = scmp.ne.s32.totalorder %s37, %s38
    %p49 = scmp.eq.s32.totalorder %s15, 0
    %p50 = por %p48, %p49
    %p51 = scmp.ne.s32.totalorder %s37, %s38
    %p52 = scmp.eq.s32.totalorder %s16, 1
    %p53 = por %p51, %p52
    %p55 = scmp.ne.s32.totalorder %s38, %s54
    %p56 = scmp.eq.s32.totalorder %s16, 0
    %p57 = por %p55, %p56
    %s59 = sadd.s32 %s58, 1
    %p62 = scmp.eq.s32.totalorder %s10, 1
    %p63 = scmp.ne.s32.totalorder %s58, %s60
    %p64 = scmp.eq.s32.totalorder %s10, 0
    %p65 = por %p63, %p64
    %p66 = scmp.ne.s32.totalorder %s58, %s60
    %p67 = scmp.eq.s32.totalorder %s15, 1
    %p68 = por %p66, %p67
    %p69 = scmp.ne.s32.totalorder %s60, %s61
    %p70 = scmp.eq.s32.totalorder %s15, 0
    %p71 = por %p69, %p70
    %p72 = scmp.ne.s32.totalorder %s60, %s61
    %p73 = scmp.eq.s32.totalorder %s16, 1
    %p74 = por %p72, %p73
    %p76 = scmp.ne.s32.totalorder %s61, %s75
    %p77 = scmp.eq.s32.totalorder %s16, 0
    %p78 = por %p76, %p77
    %s80 = sadd.s32 %s79, 1
    %p83 = scmp.eq.s32.totalorder %s10, 1
    %p84 = scmp.ne.s32.totalorder %s79, %s81
    %p85 = scmp.eq.s32.totalorder %s10, 0
    %p86 = por %p84, %p85
    %p87 = scmp.ne.s32.totalorder %s79, %s81
    %p88 = scmp.eq.s32.totalorder %s15, 1
    %p89 = por %p87, %p88
    %p90 = scmp.ne.s32.totalorder %s81, %s82
    %p91 = scmp.eq.s32.totalorder %s15, 0
    %p92 = por %p90, %p91
    %p93 = scmp.ne.s32.totalorder %s81, %s82
    %p94 = scmp.eq.s32.totalorder %s16, 1
    %p95 = por %p93, %p94
    %p97 = scmp.ne.s32.totalorder %s82, %s96
    %p98 = scmp.eq.s32.totalorder %s16, 0
    %p99 = por %p97, %p98
    %s101 = sadd.s32 %s100, 1
    %p104 = scmp.eq.s32.totalorder %s10, 1
    %p105 = scmp.ne.s32.totalorder %s100, %s102
    %p106 = scmp.eq.s32.totalorder %s10, 0
    %p107 = por %p105, %p106
    %p108 = scmp.ne.s32.totalorder %s100, %s102
    %p109 = scmp.eq.s32.totalorder %s15, 1
    %p110 = por %p108, %p109
    %p111 = scmp.ne.s32.totalorder %s102, %s103
    %p112 = scmp.eq.s32.totalorder %s15, 0
    %p113 = por %p111, %p112
    %p114 = scmp.ne.s32.totalorder %s102, %s103
    %p115 = scmp.eq.s32.totalorder %s16, 1
    %p116 = por %p114, %p115
    %p118 = scmp.ne.s32.totalorder %s103, %s117
    %p119 = scmp.eq.s32.totalorder %s16, 0
    %p120 = por %p118, %p119
    %s121 = ssub.s32 %s17, %s29
    %s122 = ssub.s32 %s18, %s25
    %s123 = sor.u32 %s121, %s122
    %p124 = scmp.eq.s32.totalorder %s123, 0
    %s126 = sadd.s32 %s125, 1
    %s127 = scalar_select %p124, %s125, %s126
    %p130 = pneg %p124
    %p131 = scmp.eq.s32.totalorder %s10, 1
    %p132 = por %p130, %p131
    %p133 = scmp.ne.s32.totalorder %s125, %s128
    %p134 = scmp.eq.s32.totalorder %s10, 0
    %p135 = por %p133, %p134
    %p136 = scmp.ne.s32.totalorder %s125, %s128
    %p137 = scmp.eq.s32.totalorder %s15, 1
    %p138 = por %p136, %p137
    %p139 = scmp.ne.s32.totalorder %s128, %s129
    %p140 = scmp.eq.s32.totalorder %s15, 0
    %p141 = por %p139, %p140
    %p142 = scmp.ne.s32.totalorder %s128, %s129
    %p143 = scmp.eq.s32.totalorder %s16, 1
    %p144 = por %p142, %p143
    %p146 = scmp.ne.s32.totalorder %s129, %s145
    %p147 = scmp.eq.s32.totalorder %s16, 0
    %p148 = por %p146, %p147
    %p149 = scmp.le.s32.totalorder 1, %s10
    %p150 = scmp.lt.s32.totalorder %s10, 3
    %p151 = pnand %p149, %p150
    %p152 = pneg %p151
    // Predicated region
    $region9: #{residual_block_forward.2} parent=5 // pred_check
      _
    $region10: #{residual_block_forward.2} parent=5 // pred_check_branch
      %154 = sbr.rel (%p151) target = $region12
    $region11: #{residual_block_forward.2} parent=5 // pred_region
      %s155 = ssub.s32 %s10, 1
      // Predicated region
      $region13: #{residual_block_forward.2} parent=11 // pred_check
        %p156 = pneg %p71
      $region14: #{residual_block_forward.2} parent=11 // pred_check_branch
        %158 = sbr.rel (%p156) target = $region16
      $region15: #{residual_block_forward.2} parent=11 // pred_region
        _
      $region16: #{residual_block_forward.2} parent=11 // pred_fallthru
        _
      // Predicated region
      $region17: #{residual_block_forward.2} parent=11 // pred_check
        %p159 = pneg %p92
      $region18: #{residual_block_forward.2} parent=11 // pred_check_branch
        %161 = sbr.rel (%p159) target = $region20
      $region19: #{residual_block_forward.2} parent=11 // pred_region
        _
      $region20: #{residual_block_forward.2} parent=11 // pred_fallthru
        _
      // Predicated region
      $region21: #{residual_block_forward.2} parent=11 // pred_check
        %p162 = pneg %p113
      $region22: #{residual_block_forward.2} parent=11 // pred_check_branch
        %164 = sbr.rel (%p162) target = $region24
      $region23: #{residual_block_forward.2} parent=11 // pred_region
        _
      $region24: #{residual_block_forward.2} parent=11 // pred_fallthru
        _
    $region12: #{residual_block_forward.2} parent=5 // pred_fallthru
      _
    %p165 = scmp.lt.s32.totalorder %s10, 2
    // Predicated region
    $region25: #{residual_block_forward.2} parent=5 // pred_check
      %p166 = pneg %p165
    $region26: #{residual_block_forward.2} parent=5 // pred_check_branch
      %168 = sbr.rel (%p166) target = $region28
    $region27: #{residual_block_forward.2} parent=5 // pred_region
      // Predicated region
      $region29: #{residual_block_forward.2} parent=27 // pred_check
        %p169 = pneg %p44
      $region30: #{residual_block_forward.2} parent=27 // pred_check_branch
        %171 = sbr.rel (%p169) target = $region32
      $region31: #{residual_block_forward.2} parent=27 // pred_region
        %s172 = smul.u32 8, %s18
        %p173 = scmp.lt.s32.totalorder %s17, 1
        %s174 = scalar_select %p173, %s17, 1
        %p175 = scmp.lt.s32.totalorder %s172, 7
        %s176 = scalar_select %p175, %s172, 7
        %s177 = smul.addr %s174, 8
        %s178 = sadd.s32 %s176, %s177
        %s179 = smul.addr %s178, 4
        %s180 = scalar_lea.vmem %s0, %s179
        %s181 = smul.u32 8, %s18
      $region32: #{residual_block_forward.2} parent=27 // pred_fallthru
        _
    $region28: #{residual_block_forward.2} parent=5 // pred_fallthru
      _
    %p182 = scmp.le.s32.totalorder 1, %s10
    %p183 = scmp.lt.s32.totalorder %s10, 3
    %p184 = pnand %p182, %p183
    %p185 = pneg %p184
    // Predicated region
    $region33: #{residual_block_forward.2} parent=5 // pred_check
      _
    $region34: #{residual_block_forward.2} parent=5 // pred_check_branch
      %187 = sbr.rel (%p184) target = $region36
    $region35: #{residual_block_forward.2} parent=5 // pred_region
      %s188 = ssub.s32 %s10, 1
      %s189 = smul.u32 8, %s20
      %p190 = scmp.lt.s32.totalorder %s19, 1
      %s191 = scalar_select %p190, %s19, 1
      %p192 = scmp.lt.s32.totalorder %s189, 7
      %s193 = scalar_select %p192, %s189, 7
      %s194 = smul.addr %s191, 8
      %s195 = sadd.s32 %s193, %s194
      %s196 = smul.addr %s195, 4
      %s197 = scalar_lea.vmem %s0, %s196
      %p198 = pneg %p50
      %p199 = pneg %p47
      %p200 = pneg %p71
      %p201 = pneg %p68
      %p202 = pneg %p92
      %p203 = pneg %p89
      %p204 = pneg %p113
      %p205 = pneg %p110
      %p206 = pneg %p141
      %p207 = pneg %p138
      %s208 = smul.u32 8, %s20
      %p209 = scmp.lt.s32.totalorder %s19, 1
      %s210 = scalar_select %p209, %s19, 1
      %p211 = scmp.lt.s32.totalorder %s208, 7
      %s212 = scalar_select %p211, %s208, 7
      %s213 = smul.addr %s210, 8
      %s214 = sadd.s32 %s212, %s213
      %s215 = smul.addr %s214, 4
      %s216 = scalar_lea.vmem %s4, %s215
      %s217 = smul.u32 8, %s20
      %p218 = scmp.lt.s32.totalorder %s19, 1
      %s219 = scalar_select %p218, %s19, 1
      %p220 = scmp.lt.s32.totalorder %s217, 7
      %s221 = scalar_select %p220, %s217, 7
      %s222 = smul.addr %s219, 8
      %s223 = sadd.s32 %s221, %s222
      %s224 = smul.addr %s223, 4
      %s225 = scalar_lea.vmem %s0, %s224
      %s226 = smul.u32 8, %s20
      %s227 = smul.u32 8, %s20
      %p228 = scmp.lt.s32.totalorder %s19, 1
      %s229 = scalar_select %p228, %s19, 1
      %p230 = scmp.lt.s32.totalorder %s227, 7
      %s231 = scalar_select %p230, %s227, 7
      %s232 = smul.addr %s229, 8
      %s233 = sadd.s32 %s231, %s232
      %s234 = smul.addr %s233, 4
      %s235 = scalar_lea.vmem %s4, %s234
      %s236 = smul.u32 8, %s20
      %v238 = vld [vmem:[%s225] sm:$0xf]
      %v239 = vld [vmem:[%s225 + $0x4] sm:$0xf]
      %v240 = vld [vmem:[%s225 + $0x8] sm:$0xf]
      %v241 = vld [vmem:[%s225 + $0xc] sm:$0xf]
      %v242 = vld [vmem:[%s225 + $0x10] sm:$0xf]
      %v243 = vld [vmem:[%s225 + $0x14] sm:$0xf]
      %v244 = vld [vmem:[%s225 + $0x18] sm:$0xf]
      %v245 = vld [vmem:[%s225 + $0x1c] sm:$0xf]
      %v246 = vld [vmem:[%s1] sm:$0xf]
      %v247 = vld [vmem:[%s1 + $0x4] sm:$0xf]
      %v248 = vld [vmem:[%s1 + $0x8] sm:$0xf]
      %v249 = vld [vmem:[%s1 + $0xc] sm:$0xf]
      %v250 = vld [vmem:[%s1 + $0x10] sm:$0x3]
      %v259 = vunpack.c.l.b16 %v238
      %v260 = vunpack.c.l.b16 %v239
      %v261 = vunpack.c.l.b16 %v240
      %v262 = vunpack.c.l.b16 %v241
      %v263 = vunpack.c.l.b16 %v242
      %v264 = vunpack.c.l.b16 %v243
      %v265 = vunpack.c.l.b16 %v244
      %v266 = vunpack.c.l.b16 %v245
      %v267 = vpack.c.b16 %v260, %v259
      %v268 = vpack.c.b16 %v262, %v261
      %v269 = vpack.c.b16 %v264, %v263
      %v270 = vpack.c.b16 %v266, %v265
      %v276 = vunpack.c.l.b16 %v246
      %v277 = vunpack.c.l.b16 %v247
      %v278 = vunpack.c.l.b16 %v248
      %v279 = vunpack.c.l.b16 %v249
      %v280 = vunpack.c.l.b16 %v250
      %v281 = vpack.c.b16 %v277, %v276
      %v282 = vpack.c.b16 %v279, %v278
      %v283 = vpack.c.b16 %v280, %v280
      %vm286 = vcmask 293888
      %v288 = vsel %vm286, %v267, 0
      %v291 = vsel %vm286, %v268, 0
      %v294 = vsel %vm286, %v269, 0
      %v297 = vsel %vm286, %v270, 0
      %vm299 = vcmask 1041408
      %v301 = vsel %vm299, %v283, 0
      %303 = vmatprep.subr.bf16.mxu0 0
      %304 = vmatpush1.bf16.msra.mxu0 %v281
      %305 = vmatprep.subr.bf16.mxu0 0
      %306 = vmatpush1.bf16.msra.mxu0 %v282
      %307 = vmatprep.subr.bf16.mxu0 0
      %308 = vmatpush1.bf16.msra.mxu0 %v301
      %309 = vmatprep.subr.bf16.mxu0 0
      %310 = vmatpush1.bf16.msra.mxu0 0
      %311 = vmatprep.subr.bf16.mxu0 0
      %312 = vmatpush1.bf16.msra.mxu0 0
      %313 = vmatprep.subr.bf16.mxu0 0
      %314 = vmatpush1.bf16.msra.mxu0 0
      %315 = vmatprep.subr.bf16.mxu0 0
      %316 = vmatpush1.bf16.msra.mxu0 0
      %317 = vmatprep.subr.bf16.mxu0 0
      %318 = vmatpush1.bf16.msra.mxu0 0
      %319 = vmatprep.subr.bf16.mxu0 0
      %320 = vmatpush1.bf16.msra.mxu0 0
      %321 = vmatprep.subr.bf16.mxu0 0
      %322 = vmatpush1.bf16.msra.mxu0 0
      %323 = vmatprep.subr.bf16.mxu0 0
      %324 = vmatpush1.bf16.msra.mxu0 0
      %325 = vmatprep.subr.bf16.mxu0 0
      %326 = vmatpush1.bf16.msra.mxu0 0
      %327 = vmatprep.subr.bf16.mxu0 0
      %328 = vmatpush1.bf16.msra.mxu0 0
      %329 = vmatprep.subr.bf16.mxu0 0
      %330 = vmatpush1.bf16.msra.mxu0 0
      %331 = vmatprep.subr.bf16.mxu0 0
      %332 = vmatpush1.bf16.msra.mxu0 0
      %333 = vmatprep.subr.bf16.mxu0 0
      %334 = vmatpush1.bf16.msra.mxu0 0
      %335 = vmatprep.mubr.bf16.mxu0 0
      %336 = vmatmul.mubr.bf16.gmra.mrb[0].mxu0 %v288
      %v337 = vpop.f32.mrb[0].mxu0
      %v338 = vadd.f32 0.0, %v337
      %v339 = vpop.f32.mrb[0].mxu0
      %v340 = vpop.f32.mrb[0].mxu0
      %v341 = vadd.f32 0.0, %v340
      %v342 = vpop.f32.mrb[0].mxu0
      %343 = vmatprep.mubr.bf16.mxu0 0
      %344 = vmatmul.mubr.bf16.gmra.mrb[0].mxu0 %v291
      %v345 = vpop.f32.mrb[0].mxu0
      %v346 = vadd.f32 0.0, %v345
      %v347 = vpop.f32.mrb[0].mxu0
      %v348 = vpop.f32.mrb[0].mxu0
      %v349 = vadd.f32 0.0, %v348
      %v350 = vpop.f32.mrb[0].mxu0
      %351 = vmatprep.mubr.bf16.mxu0 0
      %352 = vmatmul.mubr.bf16.gmra.mrb[0].mxu0 %v294
      %v353 = vpop.f32.mrb[0].mxu0
      %v354 = vadd.f32 0.0, %v353
      %v355 = vpop.f32.mrb[0].mxu0
      %v356 = vpop.f32.mrb[0].mxu0
      %v357 = vadd.f32 0.0, %v356
      %v358 = vpop.f32.mrb[0].mxu0
      %359 = vmatprep.mubr.bf16.mxu0 0
      %360 = vmatmul.mubr.bf16.gmra.mrb[0].mxu0 %v297
      %v361 = vpop.f32.mrb[0].mxu0
      %v362 = vadd.f32 0.0, %v361
      %v363 = vpop.f32.mrb[0].mxu0
      %v364 = vpop.f32.mrb[0].mxu0
      %v365 = vadd.f32 0.0, %v364
      %v366 = vpop.f32.mrb[0].mxu0
      %367 = vdwg.mxu0
      %v368 = vld [vmem:[%s2] sm:$0x1]
      %v370 = vlaneseq
      %v371 = vshrl.u32 %v370, 7
      %v372 = vsub.s32 0, %v371
      %v373 = vrot.slane %v368, %v372
      %v375 = vmul.f32 %v338, %v373
      %v376 = vmul.f32 %v341, %v373
      %v377 = vmul.f32 %v346, %v373
      %v378 = vmul.f32 %v349, %v373
      %v379 = vmul.f32 %v354, %v373
      %v380 = vmul.f32 %v357, %v373
      %v381 = vmul.f32 %v362, %v373
      %v382 = vmul.f32 %v365, %v373
      %v383 = vld [vmem:[%s3] sm:$0x1]
      %v385 = vlaneseq
      %v386 = vshrl.u32 %v385, 7
      %v387 = vsub.s32 0, %v386
      %v388 = vrot.slane %v383, %v387
      %v390 = vadd.f32 %v375, %v388
      %v391 = vadd.f32 %v376, %v388
      %v392 = vadd.f32 %v377, %v388
      %v393 = vadd.f32 %v378, %v388
      %v394 = vadd.f32 %v379, %v388
      %v395 = vadd.f32 %v380, %v388
      %v396 = vadd.f32 %v381, %v388
      %v397 = vadd.f32 %v382, %v388
      %v398 = vmax.f32 %v390, 0.0
      %v399 = vmax.f32 %v391, 0.0
      %v400 = vmax.f32 %v392, 0.0
      %v401 = vmax.f32 %v393, 0.0
      %v402 = vmax.f32 %v394, 0.0
      %v403 = vmax.f32 %v395, 0.0
      %v404 = vmax.f32 %v396, 0.0
      %v405 = vmax.f32 %v397, 0.0
      %v406 = vpack.c.bf16 %v398, %v398
      %v407 = vpack.c.bf16 %v399, %v399
      %v408 = vpack.c.bf16 %v400, %v400
      %v409 = vpack.c.bf16 %v401, %v401
      %v410 = vpack.c.bf16 %v402, %v402
      %v411 = vpack.c.bf16 %v403, %v403
      %v412 = vpack.c.bf16 %v404, %v404
      %v413 = vpack.c.bf16 %v405, %v405
      %vm414 = vcmask 60416
      %415 = vst.msk [vmem:[%s235] sm:$0xf] %vm414, %v406
      %416 = vst.msk [vmem:[%s235 + $0x4] sm:$0xf] %vm414, %v407
      %417 = vst.msk [vmem:[%s235 + $0x8] sm:$0xf] %vm414, %v408
      %418 = vst.msk [vmem:[%s235 + $0xc] sm:$0xf] %vm414, %v409
      %419 = vst.msk [vmem:[%s235 + $0x10] sm:$0xf] %vm414, %v410
      %420 = vst.msk [vmem:[%s235 + $0x14] sm:$0xf] %vm414, %v411
      %421 = vst.msk [vmem:[%s235 + $0x18] sm:$0xf] %vm414, %v412
      %422 = vst.msk [vmem:[%s235 + $0x1c] sm:$0xf] %vm414, %v413
      %s423 = smul.u32 8, %s20
      %p424 = scmp.lt.s32.totalorder %s19, 1
      %s425 = scalar_select %p424, %s19, 1
      %p426 = scmp.lt.s32.totalorder %s423, 7
      %s427 = scalar_select %p426, %s423, 7
      %s428 = smul.addr %s425, 8
      %s429 = sadd.s32 %s427, %s428
      %s430 = smul.addr %s429, 4
      %s431 = scalar_lea.vmem %s4, %s430
      // Predicated region
      $region37: #{residual_block_forward.2} parent=35 // pred_check
        %p432 = pneg %p138
      $region38: #{residual_block_forward.2} parent=35 // pred_check_branch
        %434 = sbr.rel (%p432) target = $region40
      $region39: #{residual_block_forward.2} parent=35 // pred_region
        %s435 = smul.u32 8, %s20
      $region40: #{residual_block_forward.2} parent=35 // pred_fallthru
        _
    $region36: #{residual_block_forward.2} parent=5 // pred_fallthru
      _
    %p436 = scmp.le.s32.totalorder 2, %s10
    // Predicated region
    $region41: #{residual_block_forward.2} parent=5 // pred_check
      %p437 = pneg %p436
    $region42: #{residual_block_forward.2} parent=5 // pred_check_branch
      %439 = sbr.rel (%p437) target = $region44
    $region43: #{residual_block_forward.2} parent=5 // pred_region
      %s440 = ssub.s32 %s10, 2
      // Predicated region
      $region45: #{residual_block_forward.2} parent=43 // pred_check
        %p441 = pneg %p144
      $region46: #{residual_block_forward.2} parent=43 // pred_check_branch
        %443 = sbr.rel (%p441) target = $region48
      $region47: #{residual_block_forward.2} parent=43 // pred_region
        %s444 = smul.u32 8, %s22
        %p445 = scmp.lt.s32.totalorder %s21, 1
        %s446 = scalar_select %p445, %s21, 1
        %p447 = scmp.lt.s32.totalorder %s444, 7
        %s448 = scalar_select %p447, %s444, 7
        %s449 = smul.addr %s446, 8
        %s450 = sadd.s32 %s448, %s449
        %s451 = smul.addr %s450, 4
        %s452 = scalar_lea.vmem %s4, %s451
      $region48: #{residual_block_forward.2} parent=43 // pred_fallthru
        _
    $region44: #{residual_block_forward.2} parent=5 // pred_fallthru
      _
  $region6: #{residual_block_forward.2} parent=0 // loop_footer
    %s14 = sadd.s32 1, %s10
  $region7: #{residual_block_forward.2} parent=0 // loop_footer_branch
    %9 = sbr.rel target = $region3
  $region8: #{residual_block_forward.2} parent=0 // loop_exit
    _

// kernel: residual_block_forward.3
$region0: #{residual_block_forward.3}
  #allocation0 [shape = 'u32[]', space=smem, size = 0x4, offset = 0x4, fixed_abs, tag = 'smem constant byte address 0x4 - core index']
  #allocation1 [shape = 'u32[144,128]{1,0:T(1,128)}', space=vmem, size = 0x12000, scoped, tag = 'internal scratch']
  %s0 = inlined_call_operand.vmem [shape: bf16[2,8,8,72], index: 0, kind: input, shape index: {}]
  %s1 = inlined_call_operand.vmem [shape: bf16[72,8], index: 1, kind: input, shape index: {}]
  %s2 = inlined_call_operand.vmem [shape: f32[1,8], index: 2, kind: input, shape index: {}]
  %s3 = inlined_call_operand.vmem [shape: f32[1,8], index: 3, kind: input, shape index: {}]
  %s4 = inlined_call_operand.vmem [shape: bf16[2,8,8,4], index: 4, kind: input, shape index: {}]
  %s5 = inlined_call_operand.vmem [shape: bf16[4,8], index: 5, kind: input, shape index: {}]
  %s6 = inlined_call_operand.vmem [shape: f32[1,8], index: 6, kind: input, shape index: {}]
  %s7 = inlined_call_operand.vmem [shape: f32[1,8], index: 7, kind: input, shape index: {}]
  %s8 = inlined_call_operand.vmem [shape: f32[2,8,8,8], index: 8, kind: output, shape index: {}]
  %s9 = sld [smem:[#allocation0]]
  $region65: #{residual_block_forward.3} parent=0
    _
  %s11 = ssub.s32 1, %s9
  %s12 = scalar_select 0, %s11, %s9
  loop: start=0, step=1, limit=4
  $region2: #{residual_block_forward.3} parent=0 // loop_pre_header
    _
  $region3: #{residual_block_forward.3} parent=0 // loop_header
    %s14 = sphi 0, %s18
    %p15 = scmp.ge.s32.totalorder %s14, 4
    %s21 = sphi 0, %s33
    %s22 = sphi 0, %s29
    %s23 = sphi 0, %s21
    %s24 = sphi 0, %s22
    %s25 = sphi 0, %s23
    %s26 = sphi 0, %s24
    %s38 = sphi 0, %s40
    %s41 = sphi 0, %s38
    %s42 = sphi 0, %s41
    %s58 = sphi 0, %s42
    %s62 = sphi 0, %s62
    %s64 = sphi 0, %s62
    %s65 = sphi 0, %s64
    %s79 = sphi 0, %s65
    %s83 = sphi 0, %s83
    %s85 = sphi 0, %s83
    %s86 = sphi 0, %s85
    %s100 = sphi 0, %s86
    %s104 = sphi 0, %s104
    %s106 = sphi 0, %s104
    %s107 = sphi 0, %s106
    %s121 = sphi 0, %s107
    %s129 = sphi 0, %s131
    %s132 = sphi 0, %s129
    %s133 = sphi 0, %s132
    %s149 = sphi 0, %s133
    %s153 = sphi 0, %s153
    %s155 = sphi 0, %s153
    %s156 = sphi 0, %s155
    %s170 = sphi 0, %s156
    %s174 = sphi 0, %s174
    %s176 = sphi 0, %s174
    %s177 = sphi 0, %s176
    %s191 = sphi 0, %s177
    %s195 = sphi 0, %s195
    %s197 = sphi 0, %s195
    %s198 = sphi 0, %s197
    %s212 = sphi 0, %s198
    %s220 = sphi 0, %s222
    %s223 = sphi 0, %s220
    %s224 = sphi 0, %s223
    %s240 = sphi 0, %s224
  $region4: #{residual_block_forward.3} parent=0 // loop_header_branch
    %17 = sbr.rel (%p15) target = $region8
  $region5: #{residual_block_forward.3} parent=0 // loop_body
    %s19 = ssub.s32 %s14, 1
    %s20 = ssub.s32 %s14, 2
    %s27 = sadd.s32 1, %s22
    %p28 = scmp.ge.s32.totalorder %s27, 1
    %s29 = scalar_select %p28, 0, %s27
    %s30 = sadd.s32 1, %s21
    %s31 = scalar_select %p28, %s30, %s21
    %p32 = scmp.ge.s32.totalorder %s31, 2
    %s33 = scalar_select %p32, 0, %s31
    %s34 = ssub.s32 %s21, %s33
    %s35 = ssub.s32 %s22, %s29
    %s36 = sor.u32 %s34, %s35
    %p37 = scmp.eq.s32.totalorder %s36, 0
    %s39 = sadd.s32 %s38, 1
    %s40 = scalar_select %p37, %s38, %s39
    %p43 = pneg %p37
    %p44 = scmp.eq.s32.totalorder %s14, 1
    %p45 = por %p43, %p44
    %p46 = scmp.ne.s32.totalorder %s38, %s41
    %p47 = scmp.eq.s32.totalorder %s14, 0
    %p48 = por %p46, %p47
    %p49 = scmp.ne.s32.totalorder %s38, %s41
    %p50 = scmp.eq.s32.totalorder %s19, 1
    %p51 = por %p49, %p50
    %p52 = scmp.ne.s32.totalorder %s41, %s42
    %p53 = scmp.eq.s32.totalorder %s19, 0
    %p54 = por %p52, %p53
    %p55 = scmp.ne.s32.totalorder %s41, %s42
    %p56 = scmp.eq.s32.totalorder %s20, 1
    %p57 = por %p55, %p56
    %p59 = scmp.ne.s32.totalorder %s42, %s58
    %p60 = scmp.eq.s32.totalorder %s20, 0
    %p61 = por %p59, %p60
    %s63 = sadd.s32 %s62, 1
    %p66 = scmp.eq.s32.totalorder %s14, 1
    %p67 = scmp.ne.s32.totalorder %s62, %s64
    %p68 = scmp.eq.s32.totalorder %s14, 0
    %p69 = por %p67, %p68
    %p70 = scmp.ne.s32.totalorder %s62, %s64
    %p71 = scmp.eq.s32.totalorder %s19, 1
    %p72 = por %p70, %p71
    %p73 = scmp.ne.s32.totalorder %s64, %s65
    %p74 = scmp.eq.s32.totalorder %s19, 0
    %p75 = por %p73, %p74
    %p76 = scmp.ne.s32.totalorder %s64, %s65
    %p77 = scmp.eq.s32.totalorder %s20, 1
    %p78 = por %p76, %p77
    %p80 = scmp.ne.s32.totalorder %s65, %s79
    %p81 = scmp.eq.s32.totalorder %s20, 0
    %p82 = por %p80, %p81
    %s84 = sadd.s32 %s83, 1
    %p87 = scmp.eq.s32.totalorder %s14, 1
    %p88 = scmp.ne.s32.totalorder %s83, %s85
    %p89 = scmp.eq.s32.totalorder %s14, 0
    %p90 = por %p88, %p89
    %p91 = scmp.ne.s32.totalorder %s83, %s85
    %p92 = scmp.eq.s32.totalorder %s19, 1
    %p93 = por %p91, %p92
    %p94 = scmp.ne.s32.totalorder %s85, %s86
    %p95 = scmp.eq.s32.totalorder %s19, 0
    %p96 = por %p94, %p95
    %p97 = scmp.ne.s32.totalorder %s85, %s86
    %p98 = scmp.eq.s32.totalorder %s20, 1
    %p99 = por %p97, %p98
    %p101 = scmp.ne.s32.totalorder %s86, %s100
    %p102 = scmp.eq.s32.totalorder %s20, 0
    %p103 = por %p101, %p102
    %s105 = sadd.s32 %s104, 1
    %p108 = scmp.eq.s32.totalorder %s14, 1
    %p109 = scmp.ne.s32.totalorder %s104, %s106
    %p110 = scmp.eq.s32.totalorder %s14, 0
    %p111 = por %p109, %p110
    %p112 = scmp.ne.s32.totalorder %s104, %s106
    %p113 = scmp.eq.s32.totalorder %s19, 1
    %p114 = por %p112, %p113
    %p115 = scmp.ne.s32.totalorder %s106, %s107
    %p116 = scmp.eq.s32.totalorder %s19, 0
    %p117 = por %p115, %p116
    %p118 = scmp.ne.s32.totalorder %s106, %s107
    %p119 = scmp.eq.s32.totalorder %s20, 1
    %p120 = por %p118, %p119
    %p122 = scmp.ne.s32.totalorder %s107, %s121
    %p123 = scmp.eq.s32.totalorder %s20, 0
    %p124 = por %p122, %p123
    %s125 = ssub.s32 %s21, %s33
    %s126 = ssub.s32 %s22, %s29
    %s127 = sor.u32 %s125, %s126
    %p128 = scmp.eq.s32.totalorder %s127, 0
    %s130 = sadd.s32 %s129, 1
    %s131 = scalar_select %p128, %s129, %s130
    %p134 = pneg %p128
    %p135 = scmp.eq.s32.totalorder %s14, 1
    %p136 = por %p134, %p135
    %p137 = scmp.ne.s32.totalorder %s129, %s132
    %p138 = scmp.eq.s32.totalorder %s14, 0
    %p139 = por %p137, %p138
    %p140 = scmp.ne.s32.totalorder %s129, %s132
    %p141 = scmp.eq.s32.totalorder %s19, 1
    %p142 = por %p140, %p141
    %p143 = scmp.ne.s32.totalorder %s132, %s133
    %p144 = scmp.eq.s32.totalorder %s19, 0
    %p145 = por %p143, %p144
    %p146 = scmp.ne.s32.totalorder %s132, %s133
    %p147 = scmp.eq.s32.totalorder %s20, 1
    %p148 = por %p146, %p147
    %p150 = scmp.ne.s32.totalorder %s133, %s149
    %p151 = scmp.eq.s32.totalorder %s20, 0
    %p152 = por %p150, %p151
    %s154 = sadd.s32 %s153, 1
    %p157 = scmp.eq.s32.totalorder %s14, 1
    %p158 = scmp.ne.s32.totalorder %s153, %s155
    %p159 = scmp.eq.s32.totalorder %s14, 0
    %p160 = por %p158, %p159
    %p161 = scmp.ne.s32.totalorder %s153, %s155
    %p162 = scmp.eq.s32.totalorder %s19, 1
    %p163 = por %p161, %p162
    %p164 = scmp.ne.s32.totalorder %s155, %s156
    %p165 = scmp.eq.s32.totalorder %s19, 0
    %p166 = por %p164, %p165
    %p167 = scmp.ne.s32.totalorder %s155, %s156
    %p168 = scmp.eq.s32.totalorder %s20, 1
    %p169 = por %p167, %p168
    %p171 = scmp.ne.s32.totalorder %s156, %s170
    %p172 = scmp.eq.s32.totalorder %s20, 0
    %p173 = por %p171, %p172
    %s175 = sadd.s32 %s174, 1
    %p178 = scmp.eq.s32.totalorder %s14, 1
    %p179 = scmp.ne.s32.totalorder %s174, %s176
    %p180 = scmp.eq.s32.totalorder %s14, 0
    %p181 = por %p179, %p180
    %p182 = scmp.ne.s32.totalorder %s174, %s176
    %p183 = scmp.eq.s32.totalorder %s19, 1
    %p184 = por %p182, %p183
    %p185 = scmp.ne.s32.totalorder %s176, %s177
    %p186 = scmp.eq.s32.totalorder %s19, 0
    %p187 = por %p185, %p186
    %p188 = scmp.ne.s32.totalorder %s176, %s177
    %p189 = scmp.eq.s32.totalorder %s20, 1
    %p190 = por %p188, %p189
    %p192 = scmp.ne.s32.totalorder %s177, %s191
    %p193 = scmp.eq.s32.totalorder %s20, 0
    %p194 = por %p192, %p193
    %s196 = sadd.s32 %s195, 1
    %p199 = scmp.eq.s32.totalorder %s14, 1
    %p200 = scmp.ne.s32.totalorder %s195, %s197
    %p201 = scmp.eq.s32.totalorder %s14, 0
    %p202 = por %p200, %p201
    %p203 = scmp.ne.s32.totalorder %s195, %s197
    %p204 = scmp.eq.s32.totalorder %s19, 1
    %p205 = por %p203, %p204
    %p206 = scmp.ne.s32.totalorder %s197, %s198
    %p207 = scmp.eq.s32.totalorder %s19, 0
    %p208 = por %p206, %p207
    %p209 = scmp.ne.s32.totalorder %s197, %s198
    %p210 = scmp.eq.s32.totalorder %s20, 1
    %p211 = por %p209, %p210
    %p213 = scmp.ne.s32.totalorder %s198, %s212
    %p214 = scmp.eq.s32.totalorder %s20, 0
    %p215 = por %p213, %p214
    %s216 = ssub.s32 %s21, %s33
    %s217 = ssub.s32 %s22, %s29
    %s218 = sor.u32 %s216, %s217
    %p219 = scmp.eq.s32.totalorder %s218, 0
    %s221 = sadd.s32 %s220, 1
    %s222 = scalar_select %p219, %s220, %s221
    %p225 = pneg %p219
    %p226 = scmp.eq.s32.totalorder %s14, 1
    %p227 = por %p225, %p226
    %p228 = scmp.ne.s32.totalorder %s220, %s223
    %p229 = scmp.eq.s32.totalorder %s14, 0
    %p230 = por %p228, %p229
    %p231 = scmp.ne.s32.totalorder %s220, %s223
    %p232 = scmp.eq.s32.totalorder %s19, 1
    %p233 = por %p231, %p232
    %p234 = scmp.ne.s32.totalorder %s223, %s224
    %p235 = scmp.eq.s32.totalorder %s19, 0
    %p236 = por %p234, %p235
    %p237 = scmp.ne.s32.totalorder %s223, %s224
    %p238 = scmp.eq.s32.totalorder %s20, 1
    %p239 = por %p237, %p238
    %p241 = scmp.ne.s32.totalorder %s224, %s240
    %p242 = scmp.eq.s32.totalorder %s20, 0
    %p243 = por %p241, %p242
    %p244 = scmp.le.s32.totalorder 1, %s14
    %p245 = scmp.lt.s32.totalorder %s14, 3
    %p246 = pnand %p244, %p245
    %p247 = pneg %p246
    // Predicated region
    $region9: #{residual_block_forward.3} parent=5 // pred_check
      _
    $region10: #{residual_block_forward.3} parent=5 // pred_check_branch
      %249 = sbr.rel (%p246) target = $region12
    $region11: #{residual_block_forward.3} parent=5 // pred_region
      %s250 = ssub.s32 %s14, 1
      // Predicated region
      $region13: #{residual_block_forward.3} parent=11 // pred_check
        %p251 = pneg %p75
      $region14: #{residual_block_forward.3} parent=11 // pred_check_branch
        %253 = sbr.rel (%p251) target = $region16
      $region15: #{residual_block_forward.3} parent=11 // pred_region
        _
      $region16: #{residual_block_forward.3} parent=11 // pred_fallthru
        _
      // Predicated region
      $region17: #{residual_block_forward.3} parent=11 // pred_check
        %p254 = pneg %p96
      $region18: #{residual_block_forward.3} parent=11 // pred_check_branch
        %256 = sbr.rel (%p254) target = $region20
      $region19: #{residual_block_forward.3} parent=11 // pred_region
        _
      $region20: #{residual_block_forward.3} parent=11 // pred_fallthru
        _
      // Predicated region
      $region21: #{residual_block_forward.3} parent=11 // pred_check
        %p257 = pneg %p117
      $region22: #{residual_block_forward.3} parent=11 // pred_check_branch
        %259 = sbr.rel (%p257) target = $region24
      $region23: #{residual_block_forward.3} parent=11 // pred_region
        _
      $region24: #{residual_block_forward.3} parent=11 // pred_fallthru
        _
      // Predicated region
      $region25: #{residual_block_forward.3} parent=11 // pred_check
        %p260 = pneg %p166
      $region26: #{residual_block_forward.3} parent=11 // pred_check_branch
        %262 = sbr.rel (%p260) target = $region28
      $region27: #{residual_block_forward.3} parent=11 // pred_region
        _
      $region28: #{residual_block_forward.3} parent=11 // pred_fallthru
        _
      // Predicated region
      $region29: #{residual_block_forward.3} parent=11 // pred_check
        %p263 = pneg %p187
      $region30: #{residual_block_forward.3} parent=11 // pred_check_branch
        %265 = sbr.rel (%p263) target = $region32
      $region31: #{residual_block_forward.3} parent=11 // pred_region
        _
      $region32: #{residual_block_forward.3} parent=11 // pred_fallthru
        _
      // Predicated region
      $region33: #{residual_block_forward.3} parent=11 // pred_check
        %p266 = pneg %p208
      $region34: #{residual_block_forward.3} parent=11 // pred_check_branch
        %268 = sbr.rel (%p266) target = $region36
      $region35: #{residual_block_forward.3} parent=11 // pred_region
        _
      $region36: #{residual_block_forward.3} parent=11 // pred_fallthru
        _
    $region12: #{residual_block_forward.3} parent=5 // pred_fallthru
      _
    %p269 = scmp.lt.s32.totalorder %s14, 2
    // Predicated region
    $region37: #{residual_block_forward.3} parent=5 // pred_check
      %p270 = pneg %p269
    $region38: #{residual_block_forward.3} parent=5 // pred_check_branch
      %272 = sbr.rel (%p270) target = $region40
    $region39: #{residual_block_forward.3} parent=5 // pred_region
      // Predicated region
      $region41: #{residual_block_forward.3} parent=39 // pred_check
        %p273 = pneg %p48
      $region42: #{residual_block_forward.3} parent=39 // pred_check_branch
        %275 = sbr.rel (%p273) target = $region44
      $region43: #{residual_block_forward.3} parent=39 // pred_region
        %s276 = smul.u32 8, %s22
        %p277 = scmp.lt.s32.totalorder %s21, 1
        %s278 = scalar_select %p277, %s21, 1
        %p279 = scmp.lt.s32.totalorder %s276, 7
        %s280 = scalar_select %p279, %s276, 7
        %s281 = smul.addr %s278, 8
        %s282 = sadd.s32 %s280, %s281
        %s283 = smul.addr %s282, 4
        %s284 = scalar_lea.vmem %s0, %s283
        %s285 = smul.u32 8, %s22
      $region44: #{residual_block_forward.3} parent=39 // pred_fallthru
        _
      // Predicated region
      $region45: #{residual_block_forward.3} parent=39 // pred_check
        %p286 = pneg %p139
      $region46: #{residual_block_forward.3} parent=39 // pred_check_branch
        %288 = sbr.rel (%p286) target = $region48
      $region47: #{residual_block_forward.3} parent=39 // pred_region
        %s289 = smul.u32 8, %s22
        %p290 = scmp.lt.s32.totalorder %s21, 1
        %s291 = scalar_select %p290, %s21, 1
        %p292 = scmp.lt.s32.totalorder %s289, 7
        %s293 = scalar_select %p292, %s289, 7
        %s294 = smul.addr %s291, 8
        %s295 = sadd.s32 %s293, %s294
        %s296 = smul.addr %s295, 4
        %s297 = scalar_lea.vmem %s4, %s296
        %s298 = smul.u32 8, %s22
      $region48: #{residual_block_forward.3} parent=39 // pred_fallthru
        _
    $region40: #{residual_block_forward.3} parent=5 // pred_fallthru
      _
    %p299 = scmp.le.s32.totalorder 1, %s14
    %p300 = scmp.lt.s32.totalorder %s14, 3
    %p301 = pnand %p299, %p300
    %p302 = pneg %p301
    // Predicated region
    $region49: #{residual_block_forward.3} parent=5 // pred_check
      _
    $region50: #{residual_block_forward.3} parent=5 // pred_check_branch
      %304 = sbr.rel (%p301) target = $region52
    $region51: #{residual_block_forward.3} parent=5 // pred_region
      %s305 = ssub.s32 %s14, 1
      %s306 = smul.u32 8, %s24
      %p307 = scmp.lt.s32.totalorder %s23, 1
      %s308 = scalar_select %p307, %s23, 1
      %p309 = scmp.lt.s32.totalorder %s306, 7
      %s310 = scalar_select %p309, %s306, 7
      %s311 = smul.addr %s308, 8
      %s312 = sadd.s32 %s310, %s311
      %s313 = smul.addr %s312, 4
      %s314 = scalar_lea.vmem %s0, %s313
      %p315 = pneg %p54
      %p316 = pneg %p51
      %p317 = pneg %p75
      %p318 = pneg %p72
      %p319 = pneg %p96
      %p320 = pneg %p93
      %p321 = pneg %p117
      %p322 = pneg %p114
      %s323 = smul.u32 8, %s24
      %p324 = scmp.lt.s32.totalorder %s23, 1
      %s325 = scalar_select %p324, %s23, 1
      %p326 = scmp.lt.s32.totalorder %s323, 7
      %s327 = scalar_select %p326, %s323, 7
      %s328 = smul.addr %s325, 8
      %s329 = sadd.s32 %s327, %s328
      %s330 = smul.addr %s329, 4
      %s331 = scalar_lea.vmem %s4, %s330
      %p332 = pneg %p145
      %p333 = pneg %p142
      %p334 = pneg %p166
      %p335 = pneg %p163
      %p336 = pneg %p187
      %p337 = pneg %p184
      %p338 = pneg %p208
      %p339 = pneg %p205
      %p340 = pneg %p236
      %p341 = pneg %p233
      %s342 = smul.u32 8, %s24
      %p343 = scmp.lt.s32.totalorder %s23, 1
      %s344 = scalar_select %p343, %s23, 1
      %p345 = scmp.lt.s32.totalorder %s342, 7
      %s346 = scalar_select %p345, %s342, 7
      %s347 = smul.addr %s344, 8
      %s348 = sadd.s32 %s346, %s347
      %s349 = smul.addr %s348, 8
      %s350 = scalar_lea.vmem %s8, %s349
      %s351 = smul.u32 8, %s24
      %p352 = scmp.lt.s32.totalorder %s23, 1
      %s353 = scalar_select %p352, %s23, 1
      %p354 = scmp.lt.s32.totalorder %s351, 7
      %s355 = scalar_select %p354, %s351, 7
      %s356 = smul.addr %s353, 8
      %s357 = sadd.s32 %s355, %s356
      %s358 = smul.addr %s357, 4
      %s359 = scalar_lea.vmem %s0, %s358
      %s360 = smul.u32 8, %s24
      %s361 = smul.u32 8, %s24
      %p362 = scmp.lt.s32.totalorder %s23, 1
      %s363 = scalar_select %p362, %s23, 1
      %p364 = scmp.lt.s32.totalorder %s361, 7
      %s365 = scalar_select %p364, %s361, 7
      %s366 = smul.addr %s363, 8
      %s367 = sadd.s32 %s365, %s366
      %s368 = smul.addr %s367, 4
      %s369 = scalar_lea.vmem %s4, %s368
      %s370 = smul.u32 8, %s24
      %s371 = smul.u32 8, %s24
      %p372 = scmp.lt.s32.totalorder %s23, 1
      %s373 = scalar_select %p372, %s23, 1
      %p374 = scmp.lt.s32.totalorder %s371, 7
      %s375 = scalar_select %p374, %s371, 7
      %s376 = smul.addr %s373, 8
      %s377 = sadd.s32 %s375, %s376
      %s378 = smul.addr %s377, 8
      %s379 = scalar_lea.vmem %s8, %s378
      %s380 = smul.u32 8, %s24
      %v382 = vld [vmem:[%s359] sm:$0xf]
      %v383 = vld [vmem:[%s359 + $0x4] sm:$0xf]
      %v384 = vld [vmem:[%s359 + $0x8] sm:$0xf]
      %v385 = vld [vmem:[%s359 + $0xc] sm:$0xf]
      %v386 = vld [vmem:[%s359 + $0x10] sm:$0xf]
      %v387 = vld [vmem:[%s359 + $0x14] sm:$0xf]
      %v388 = vld [vmem:[%s359 + $0x18] sm:$0xf]
      %v389 = vld [vmem:[%s359 + $0x1c] sm:$0xf]
      %v390 = vld [vmem:[%s1] sm:$0xf]
      %v391 = vld [vmem:[%s1 + $0x4] sm:$0xf]
      %v392 = vld [vmem:[%s1 + $0x8] sm:$0xf]
      %v393 = vld [vmem:[%s1 + $0xc] sm:$0xf]
      %v394 = vld [vmem:[%s1 + $0x10] sm:$0xf]
      %v395 = vld [vmem:[%s1 + $0x14] sm:$0xf]
      %v396 = vld [vmem:[%s1 + $0x18] sm:$0xf]
      %v397 = vld [vmem:[%s1 + $0x1c] sm:$0xf]
      %v398 = vld [vmem:[%s1 + $0x20] sm:$0xf]
      %v407 = vunpack.c.l.b16 %v382
      %v408 = vunpack.c.l.b16 %v383
      %v409 = vunpack.c.l.b16 %v384
      %v410 = vunpack.c.l.b16 %v385
      %v411 = vunpack.c.l.b16 %v386
      %v412 = vunpack.c.l.b16 %v387
      %v413 = vunpack.c.l.b16 %v388
      %v414 = vunpack.c.l.b16 %v389
      %v415 = vpack.c.b16 %v408, %v407
      %v416 = vpack.c.b16 %v410, %v409
      %v417 = vpack.c.b16 %v412, %v411
      %v418 = vpack.c.b16 %v414, %v413
      %v428 = vunpack.c.l.b16 %v390
      %v429 = vunpack.c.l.b16 %v391
      %v430 = vunpack.c.l.b16 %v392
      %v431 = vunpack.c.l.b16 %v393
      %v432 = vunpack.c.l.b16 %v394
      %v433 = vunpack.c.l.b16 %v395
      %v434 = vunpack.c.l.b16 %v396
      %v435 = vunpack.c.l.b16 %v397
      %v436 = vunpack.c.l.b16 %v398
      %v437 = vpack.c.b16 %v429, %v428
      %v438 = vpack.c.b16 %v431, %v430
      %v439 = vpack.c.b16 %v433, %v432
      %v440 = vpack.c.b16 %v435, %v434
      %v441 = vpack.c.b16 %v436, %v436
      %vm446 = vcmask 588800
      %v448 = vsel %vm446, %v415, 0
      %v451 = vsel %vm446, %v416, 0
      %v454 = vsel %vm446, %v417, 0
      %v457 = vsel %vm446, %v418, 0
      %vm459 = vcmask 1043456
      %v461 = vsel %vm459, %v441, 0
      %463 = vmatprep.subr.bf16.mxu0 0
      %464 = vmatpush1.bf16.msra.mxu0 %v437
      %465 = vmatprep.subr.bf16.mxu0 0
      %466 = vmatpush1.bf16.msra.mxu0 %v438
      %467 = vmatprep.subr.bf16.mxu0 0
      %468 = vmatpush1.bf16.msra.mxu0 %v439
      %469 = vmatprep.subr.bf16.mxu0 0
      %470 = vmatpush1.bf16.msra.mxu0 %v440
      %471 = vmatprep.subr.bf16.mxu0 0
      %472 = vmatpush1.bf16.msra.mxu0 %v461
      %473 = vmatprep.subr.bf16.mxu0 0
      %474 = vmatpush1.bf16.msra.mxu0 0
      %475 = vmatprep.subr.bf16.mxu0 0
      %476 = vmatpush1.bf16.msra.mxu0 0
      %477 = vmatprep.subr.bf16.mxu0 0
      %478 = vmatpush1.bf16.msra.mxu0 0
      %479 = vmatprep.subr.bf16.mxu0 0
      %480 = vmatpush1.bf16.msra.mxu0 0
      %481 = vmatprep.subr.bf16.mxu0 0
      %482 = vmatpush1.bf16.msra.mxu0 0
      %483 = vmatprep.subr.bf16.mxu0 0
      %484 = vmatpush1.bf16.msra.mxu0 0
      %485 = vmatprep.subr.bf16.mxu0 0
      %486 = vmatpush1.bf16.msra.mxu0 0
      %487 = vmatprep.subr.bf16.mxu0 0
      %488 = vmatpush1.bf16.msra.mxu0 0
      %489 = vmatprep.subr.bf16.mxu0 0
      %490 = vmatpush1.bf16.msra.mxu0 0
      %491 = vmatprep.subr.bf16.mxu0 0
      %492 = vmatpush1.bf16.msra.mxu0 0
      %493 = vmatprep.subr.bf16.mxu0 0
      %494 = vmatpush1.bf16.msra.mxu0 0
      %495 = vmatprep.mubr.bf16.mxu0 0
      %496 = vmatmul.mubr.bf16.gmra.mrb[0].mxu0 %v448
      %v497 = vpop.f32.mrb[0].mxu0
      %v498 = vadd.f32 0.0, %v497
      %v499 = vpop.f32.mrb[0].mxu0
      %v500 = vpop.f32.mrb[0].mxu0
      %v501 = vadd.f32 0.0, %v500
      %v502 = vpop.f32.mrb[0].mxu0
      %503 = vmatprep.mubr.bf16.mxu0 0
      %504 = vmatmul.mubr.bf16.gmra.mrb[0].mxu0 %v451
      %v505 = vpop.f32.mrb[0].mxu0
      %v506 = vadd.f32 0.0, %v505
      %v507 = vpop.f32.mrb[0].mxu0
      %v508 = vpop.f32.mrb[0].mxu0
      %v509 = vadd.f32 0.0, %v508
      %v510 = vpop.f32.mrb[0].mxu0
      %511 = vmatprep.mubr.bf16.mxu0 0
      %512 = vmatmul.mubr.bf16.gmra.mrb[0].mxu0 %v454
      %v513 = vpop.f32.mrb[0].mxu0
      %v514 = vadd.f32 0.0, %v513
      %v515 = vpop.f32.mrb[0].mxu0
      %v516 = vpop.f32.mrb[0].mxu0
      %v517 = vadd.f32 0.0, %v516
      %v518 = vpop.f32.mrb[0].mxu0
      %519 = vmatprep.mubr.bf16.mxu0 0
      %520 = vmatmul.mubr.bf16.gmra.mrb[0].mxu0 %v457
      %v521 = vpop.f32.mrb[0].mxu0
      %v522 = vadd.f32 0.0, %v521
      %v523 = vpop.f32.mrb[0].mxu0
      %v524 = vpop.f32.mrb[0].mxu0
      %v525 = vadd.f32 0.0, %v524
      %v526 = vpop.f32.mrb[0].mxu0
      %527 = vdwg.mxu0
      %v528 = vld [vmem:[%s2] sm:$0x1]
      %v530 = vlaneseq
      %v531 = vshrl.u32 %v530, 7
      %v532 = vsub.s32 0, %v531
      %v533 = vrot.slane %v528, %v532
      %v535 = vmul.f32 %v498, %v533
      %v536 = vmul.f32 %v501, %v533
      %v537 = vmul.f32 %v506, %v533
      %v538 = vmul.f32 %v509, %v533
      %v539 = vmul.f32 %v514, %v533
      %v540 = vmul.f32 %v517, %v533
      %v541 = vmul.f32 %v522, %v533
      %v542 = vmul.f32 %v525, %v533
      %v543 = vld [vmem:[%s3] sm:$0x1]
      %v545 = vlaneseq
      %v546 = vshrl.u32 %v545, 7
      %v547 = vsub.s32 0, %v546
      %v548 = vrot.slane %v543, %v547
      %v550 = vadd.f32 %v535, %v548
      %v551 = vadd.f32 %v536, %v548
      %v552 = vadd.f32 %v537, %v548
      %v553 = vadd.f32 %v538, %v548
      %v554 = vadd.f32 %v539, %v548
      %v555 = vadd.f32 %v540, %v548
      %v556 = vadd.f32 %v541, %v548
      %v557 = vadd.f32 %v542, %v548
      %v558 = vld [vmem:[%s369] sm:$0xf]
      %v559 = vld [vmem:[%s369 + $0x4] sm:$0xf]
      %v560 = vld [vmem:[%s369 + $0x8] sm:$0xf]
      %v561 = vld [vmem:[%s369 + $0xc] sm:$0xf]
      %v562 = vld [vmem:[%s369 + $0x10] sm:$0xf]
      %v563 = vld [vmem:[%s369 + $0x14] sm:$0xf]
      %v564 = vld [vmem:[%s369 + $0x18] sm:$0xf]
      %v565 = vld [vmem:[%s369 + $0x1c] sm:$0xf]
      %v566 = vld [vmem:[%s5] sm:$0x3]
      %v575 = vunpack.c.l.b16 %v558
      %v576 = vunpack.c.l.b16 %v559
      %v577 = vunpack.c.l.b16 %v560
      %v578 = vunpack.c.l.b16 %v561
      %v579 = vunpack.c.l.b16 %v562
      %v580 = vunpack.c.l.b16 %v563
      %v581 = vunpack.c.l.b16 %v564
      %v582 = vunpack.c.l.b16 %v565
      %v583 = vpack.c.b16 %v576, %v575
      %v584 = vpack.c.b16 %v578, %v577
      %v585 = vpack.c.b16 %v580, %v579
      %v586 = vpack.c.b16 %v582, %v581
      %vm587 = vcmask 31744
      %v589 = vsel %vm587, %v583, 0
      %v592 = vsel %vm587, %v584, 0
      %v595 = vsel %vm587, %v585, 0
      %v598 = vsel %vm587, %v586, 0
      %vm600 = vcmask 1041408
      %v602 = vsel %vm600, %v566, 0
      %604 = vmatprep.subr.bf16.mxu0 0
      %605 = vmatpush1.bf16.msra.mxu0 %v602
      %606 = vmatprep.subr.bf16.mxu0 0
      %607 = vmatpush1.bf16.msra.mxu0 0
      %608 = vmatprep.subr.bf16.mxu0 0
      %609 = vmatpush1.bf16.msra.mxu0 0
      %610 = vmatprep.subr.bf16.mxu0 0
      %611 = vmatpush1.bf16.msra.mxu0 0
      %612 = vmatprep.subr.bf16.mxu0 0
      %613 = vmatpush1.bf16.msra.mxu0 0
      %614 = vmatprep.subr.bf16.mxu0 0
      %615 = vmatpush1.bf16.msra.mxu0 0
      %616 = vmatprep.subr.bf16.mxu0 0
      %617 = vmatpush1.bf16.msra.mxu0 0
      %618 = vmatprep.subr.bf16.mxu0 0
      %619 = vmatpush1.bf16.msra.mxu0 0
      %620 = vmatprep.subr.bf16.mxu0 0
      %621 = vmatpush1.bf16.msra.mxu0 0
      %622 = vmatprep.subr.bf16.mxu0 0
      %623 = vmatpush1.bf16.msra.mxu0 0
      %624 = vmatprep.subr.bf16.mxu0 0
      %625 = vmatpush1.bf16.msra.mxu0 0
      %626 = vmatprep.subr.bf16.mxu0 0
      %627 = vmatpush1.bf16.msra.mxu0 0
      %628 = vmatprep.subr.bf16.mxu0 0
      %629 = vmatpush1.bf16.msra.mxu0 0
      %630 = vmatprep.subr.bf16.mxu0 0
      %631 = vmatpush1.bf16.msra.mxu0 0
      %632 = vmatprep.subr.bf16.mxu0 0
      %633 = vmatpush1.bf16.msra.mxu0 0
      %634 = vmatprep.subr.bf16.mxu0 0
      %635 = vmatpush1.bf16.msra.mxu0 0
      %636 = vmatprep.mubr.bf16.mxu0 0
      %637 = vmatmul.mubr.bf16.gmra.mrb[0].mxu0 %v589
      %v638 = vpop.f32.mrb[0].mxu0
      %v639 = vadd.f32 0.0, %v638
      %v640 = vpop.f32.mrb[0].mxu0
      %v641 = vpop.f32.mrb[0].mxu0
      %v642 = vadd.f32 0.0, %v641
      %v643 = vpop.f32.mrb[0].mxu0
      %644 = vmatprep.mubr.bf16.mxu0 0
      %645 = vmatmul.mubr.bf16.gmra.mrb[0].mxu0 %v592
      %v646 = vpop.f32.mrb[0].mxu0
      %v647 = vadd.f32 0.0, %v646
      %v648 = vpop.f32.mrb[0].mxu0
      %v649 = vpop.f32.mrb[0].mxu0
      %v650 = vadd.f32 0.0, %v649
      %v651 = vpop.f32.mrb[0].mxu0
      %652 = vmatprep.mubr.bf16.mxu0 0
      %653 = vmatmul.mubr.bf16.gmra.mrb[0].mxu0 %v595
      %v654 = vpop.f32.mrb[0].mxu0
      %v655 = vadd.f32 0.0, %v654
      %v656 = vpop.f32.mrb[0].mxu0
      %v657 = vpop.f32.mrb[0].mxu0
      %v658 = vadd.f32 0.0, %v657
      %v659 = vpop.f32.mrb[0].mxu0
      %660 = vmatprep.mubr.bf16.mxu0 0
      %661 = vmatmul.mubr.bf16.gmra.mrb[0].mxu0 %v598
      %v662 = vpop.f32.mrb[0].mxu0
      %v663 = vadd.f32 0.0, %v662
      %v664 = vpop.f32.mrb[0].mxu0
      %v665 = vpop.f32.mrb[0].mxu0
      %v666 = vadd.f32 0.0, %v665
      %v667 = vpop.f32.mrb[0].mxu0
      %668 = vdwg.mxu0
      %v669 = vld [vmem:[%s6] sm:$0x1]
      %v671 = vlaneseq
      %v672 = vshrl.u32 %v671, 7
      %v673 = vsub.s32 0, %v672
      %v674 = vrot.slane %v669, %v673
      %v676 = vmul.f32 %v639, %v674
      %v677 = vmul.f32 %v642, %v674
      %v678 = vmul.f32 %v647, %v674
      %v679 = vmul.f32 %v650, %v674
      %v680 = vmul.f32 %v655, %v674
      %v681 = vmul.f32 %v658, %v674
      %v682 = vmul.f32 %v663, %v674
      %v683 = vmul.f32 %v666, %v674
      %v684 = vld [vmem:[%s7] sm:$0x1]
      %v686 = vlaneseq
      %v687 = vshrl.u32 %v686, 7
      %v688 = vsub.s32 0, %v687
      %v689 = vrot.slane %v684, %v688
      %v691 = vadd.f32 %v676, %v689
      %v692 = vadd.f32 %v677, %v689
      %v693 = vadd.f32 %v678, %v689
      %v694 = vadd.f32 %v679, %v689
      %v695 = vadd.f32 %v680, %v689
      %v696 = vadd.f32 %v681, %v689
      %v697 = vadd.f32 %v682, %v689
      %v698 = vadd.f32 %v683, %v689
      %v699 = vadd.f32 %v550, %v691
      %v700 = vadd.f32 %v551, %v692
      %v701 = vadd.f32 %v552, %v693
      %v702 = vadd.f32 %v553, %v694
      %v703 = vadd.f32 %v554, %v695
      %v704 = vadd.f32 %v555, %v696
      %v705 = vadd.f32 %v556, %v697
      %v706 = vadd.f32 %v557, %v698
      %v707 = vmax.f32 %v699, 0.0
      %v708 = vmax.f32 %v700, 0.0
      %v709 = vmax.f32 %v701, 0.0
      %v710 = vmax.f32 %v702, 0.0
      %v711 = vmax.f32 %v703, 0.0
      %v712 = vmax.f32 %v704, 0.0
      %v713 = vmax.f32 %v705, 0.0
      %v714 = vmax.f32 %v706, 0.0
      %vm715 = vcmask 64512
      %716 = vst.msk [vmem:[%s379] sm:$0xff] %vm715, %v707
      %717 = vst.msk [vmem:[%s379 + $0x8] sm:$0xff] %vm715, %v708
      %718 = vst.msk [vmem:[%s379 + $0x10] sm:$0xff] %vm715, %v709
      %719 = vst.msk [vmem:[%s379 + $0x18] sm:$0xff] %vm715, %v710
      %720 = vst.msk [vmem:[%s379 + $0x20] sm:$0xff] %vm715, %v711
      %721 = vst.msk [vmem:[%s379 + $0x28] sm:$0xff] %vm715, %v712
      %722 = vst.msk [vmem:[%s379 + $0x30] sm:$0xff] %vm715, %v713
      %723 = vst.msk [vmem:[%s379 + $0x38] sm:$0xff] %vm715, %v714
      %s724 = smul.u32 8, %s24
      %p725 = scmp.lt.s32.totalorder %s23, 1
      %s726 = scalar_select %p725, %s23, 1
      %p727 = scmp.lt.s32.totalorder %s724, 7
      %s728 = scalar_select %p727, %s724, 7
      %s729 = smul.addr %s726, 8
      %s730 = sadd.s32 %s728, %s729
      %s731 = smul.addr %s730, 8
      %s732 = scalar_lea.vmem %s8, %s731
      // Predicated region
      $region53: #{residual_block_forward.3} parent=51 // pred_check
        %p733 = pneg %p233
      $region54: #{residual_block_forward.3} parent=51 // pred_check_branch
        %735 = sbr.rel (%p733) target = $region56
      $region55: #{residual_block_forward.3} parent=51 // pred_region
        %s736 = smul.u32 8, %s24
      $region56: #{residual_block_forward.3} parent=51 // pred_fallthru
        _
    $region52: #{residual_block_forward.3} parent=5 // pred_fallthru
      _
    %p737 = scmp.le.s32.totalorder 2, %s14
    // Predicated region
    $region57: #{residual_block_forward.3} parent=5 // pred_check
      %p738 = pneg %p737
    $region58: #{residual_block_forward.3} parent=5 // pred_check_branch
      %740 = sbr.rel (%p738) target = $region60
    $region59: #{residual_block_forward.3} parent=5 // pred_region
      %s741 = ssub.s32 %s14, 2
      // Predicated region
      $region61: #{residual_block_forward.3} parent=59 // pred_check
        %p742 = pneg %p239
      $region62: #{residual_block_forward.3} parent=59 // pred_check_branch
        %744 = sbr.rel (%p742) target = $region64
      $region63: #{residual_block_forward.3} parent=59 // pred_region
        %s745 = smul.u32 8, %s26
        %p746 = scmp.lt.s32.totalorder %s25, 1
        %s747 = scalar_select %p746, %s25, 1
        %p748 = scmp.lt.s32.totalorder %s745, 7
        %s749 = scalar_select %p748, %s745, 7
        %s750 = smul.addr %s747, 8
        %s751 = sadd.s32 %s749, %s750
        %s752 = smul.addr %s751, 8
        %s753 = scalar_lea.vmem %s8, %s752
      $region64: #{residual_block_forward.3} parent=59 // pred_fallthru
        _
    $region60: #{residual_block_forward.3} parent=5 // pred_fallthru
      _
  $region6: #{residual_block_forward.3} parent=0 // loop_footer
    %s18 = sadd.s32 1, %s14
  $region7: #{residual_block_forward.3} parent=0 // loop_footer_branch
    %13 = sbr.rel target = $region3
  $region8: #{residual_block_forward.3} parent=0 // loop_exit
    _

</llo_original>
